<compile_context>
chip_gen: v7x
topology: tpu7x:2x2x1
jax: 0.10.0
libtpu: 0.0.40
codegen_flags: <defaults>
</compile_context>

<pallas_src>
import functools

import jax
import jax.numpy as jnp
from jax import lax
from jax.experimental import pallas as pl
from jax.experimental.pallas import tpu as pltpu


def _mqa_block_kernel(x_ref, wqkv_ref, bqkv_ref, wot_ref, o_ref, *,
                      num_heads, key_dim):
    # x_ref block: [C, HW] (batch squeezed; channels on sublanes, HW on lanes).
    x_f32 = x_ref[...].astype(jnp.float32)                   # residual path
    x_bf = x_f32.astype(jnp.bfloat16)                        # MXU operand
    nhk = num_heads * key_dim

    # Fused Q/K/V projection: BN (eval) and 1/sqrt(key_dim) already folded
    # into wqkv/bqkv host-side.  bf16 operands, f32 accumulation.
    qkv = jnp.dot(wqkv_ref[...], x_bf,
                  preferred_element_type=jnp.float32)        # [nhK+2K, HW] f32
    qkv = qkv + bqkv_ref[...]                                # bias [nhK+2K, 1]

    # K/V are shared across heads (MQA).  Transpose the tiny [K, HW] K tile
    # ONCE so every attention matmul below is in natural MXU orientation and
    # the big [HW, HW] probability tile is never transposed.
    k_t_bf = qkv[nhk:nhk + key_dim, :].T.astype(jnp.bfloat16)            # [HWk, K]
    v_bf = qkv[nhk + key_dim:nhk + 2 * key_dim, :].astype(jnp.bfloat16)  # [K, HWk]

    oh_list = []
    for h in range(num_heads):                               # tiny static loop
        qh_bf = qkv[h * key_dim:(h + 1) * key_dim, :].astype(jnp.bfloat16)  # [K, HWq]
        # S^T[hw_k, hw_q] = sum_k K[k, hw_k] * Q_h[k, hw_q]  (keys on sublanes,
        # queries on lanes; natural LHS/RHS orientation).
        s = lax.dot_general(k_t_bf, qh_bf, (((1,), (0,)), ((), ())),
                            preferred_element_type=jnp.float32)   # [HWk, HWq] f32
        # Softmax over keys (axis 0); stats in f32.  The row-sum is already
        # lane-aligned ([1, HWq]) so normalization is deferred off the big tile.
        s = s - jnp.max(s, axis=0, keepdims=True)
        p = jnp.exp(s)
        inv = pl.reciprocal(jnp.sum(p, axis=0, keepdims=True), approx=True)
        p_bf = p.astype(jnp.bfloat16)
        # dropout p=0.0 -> no-op
        # O_h[k, hw_q] = sum_hwk V[k, hwk] * P[hwk, hwq]  (natural orientation;
        # big operand untransposed).
        oh = lax.dot_general(v_bf, p_bf, (((1,), (0,)), ((), ())),
                             preferred_element_type=jnp.float32)   # [K, HWq] f32
        oh_list.append(oh * inv)                             # deferred softmax norm

    # Single fused output projection across all heads (LayerScale gamma folded
    # into the pre-transposed [C, nhK] weight host-side).
    oh_all = jnp.concatenate(oh_list, axis=0).astype(jnp.bfloat16)     # [nhK, HW]
    out = lax.dot_general(wot_ref[...], oh_all, (((1,), (0,)), ((), ())),
                          preferred_element_type=jnp.float32)          # [C, HW]

    # Residual uses the pre-BN input; keep add + store in f32.
    o_ref[...] = (out + x_f32).astype(o_ref.dtype)


def mha_self_attention_block(x_nchw, params, *, num_heads, key_dim):
    """Forward pass of MultiHeadSelfAttentionBlock.  x_nchw: [B, C, H, W] f32."""
    B, C, H, W = x_nchw.shape
    HW = H * W
    nhk = num_heads * key_dim
    qkv_rows = nhk + 2 * key_dim

    # NCHW -> [B, C, HW]: pure reshape, no transpose, no extra HBM pass.
    x = x_nchw.reshape(B, C, HW)

    bn_s = params['bn_scale']
    bn_b = params['bn_bias']
    wq, wk, wv, wo = params['wq'], params['wk'], params['wv'], params['wo']
    gamma = params['gamma']
    scale = key_dim ** (-0.5)

    # --- host-side folding -------------------------------------------------
    # proj(x*s + b) = (W^T * s) @ x + W^T b ; attention scale folded into Wq.
    wq_f = (wq.T * bn_s[None, :]) * scale                    # [nhK, C]
    wk_f = wk.T * bn_s[None, :]                              # [K, C]
    wv_f = wv.T * bn_s[None, :]                              # [K, C]
    bq = (bn_b @ wq) * scale                                 # [nhK]
    bk = bn_b @ wk                                           # [K]
    bv = bn_b @ wv                                           # [K]
    wqkv = jnp.concatenate([wq_f, wk_f, wv_f], axis=0).astype(jnp.bfloat16)
    bqkv = jnp.concatenate([bq, bk, bv], axis=0)[:, None].astype(jnp.float32)
    # LayerScale gamma folded into the output projection and pre-transposed to
    # [C, nhK] so the in-kernel projection is in natural MXU orientation.
    wot = (wo * gamma[None, :]).T.astype(jnp.bfloat16)       # [C, nhK]
    # ------------------------------------------------------------------------

    kernel = functools.partial(_mqa_block_kernel,
                               num_heads=num_heads, key_dim=key_dim)

    grid_spec = pltpu.PrefetchScalarGridSpec(
        num_scalar_prefetch=0,
        grid=(B,),
        in_specs=[
            pl.BlockSpec((pl.Squeezed(), C, HW), lambda b: (b, 0, 0)),  # x
            pl.BlockSpec((qkv_rows, C), lambda b: (0, 0)),              # fused Wqkv (bf16)
            pl.BlockSpec((qkv_rows, 1), lambda b: (0, 0)),              # fused bias (f32)
            pl.BlockSpec((C, nhk), lambda b: (0, 0)),                   # Wo^T (gamma folded, bf16)
        ],
        out_specs=pl.BlockSpec((pl.Squeezed(), C, HW), lambda b: (b, 0, 0)),
    )

    flops = B * (2 * C * qkv_rows * HW                 # fused QKV projection
                 + num_heads * 4 * HW * HW * key_dim   # QK^T + PV per head
                 + 2 * nhk * C * HW)                   # fused output projection
    transcendentals = B * num_heads * HW * HW          # exp
    bytes_accessed = (4 * 2 * B * C * HW               # f32 x in / out
                      + 2 * (qkv_rows * C + C * nhk)   # bf16 weights
                      + 4 * qkv_rows)                  # f32 bias

    # NOTE: activations stay f32 at the pallas_call boundary to preserve the
    # module's f32 semantics; at this shape the kernel is DMA/dispatch bound,
    # so a bf16 boundary would halve HBM bytes if the caller accepts bf16.
    out = pl.pallas_call(
        kernel,
        out_shape=jax.ShapeDtypeStruct((B, C, HW), x_nchw.dtype),
        grid_spec=grid_spec,
        compiler_params=pltpu.CompilerParams(
            dimension_semantics=("parallel",)),
        cost_estimate=pl.CostEstimate(
            flops=int(flops),
            transcendentals=int(transcendentals),
            bytes_accessed=int(bytes_accessed)),
    )(x, wqkv, bqkv, wot)

    # [B, C, HW] -> NCHW: pure reshape.
    return out.reshape(B, C, H, W)


def reference(x, p, *, num_heads, key_dim):
    """Pure-JAX f32 mirror of the PyTorch forward (NCHW), for validation."""
    B, C, H, W = x.shape
    HW = H * W
    xn = x * p['bn_scale'][None, :, None, None] + p['bn_bias'][None, :, None, None]
    # 1x1 convs
    q = jnp.einsum('bihw,io->bohw', xn, p['wq'])
    k = jnp.einsum('bihw,io->bohw', xn, p['wk'])
    v = jnp.einsum('bihw,io->bohw', xn, p['wv'])
    # _reshape_projected_query: [b, nh*K, H, W] -> [b, nh, HW, K]
    q = q.reshape(B, num_heads, key_dim, HW).transpose(0, 1, 3, 2)
    # _reshape_input: [b, K, H, W] -> [b, 1, HW, K]
    k = k.reshape(B, key_dim, HW).transpose(0, 2, 1)[:, None]
    v = v.reshape(B, key_dim, HW).transpose(0, 2, 1)[:, None]
    q = q * key_dim ** (-0.5)
    attn = jax.nn.softmax(q @ jnp.swapaxes(k, -1, -2), axis=-1)
    out = attn @ v                                        # [b, nh, HW, K]
    out = jnp.swapaxes(out, 1, 2).reshape(B, H, W, num_heads * key_dim)
    out = out.transpose(0, 3, 1, 2)
    out = jnp.einsum('bihw,io->bohw', out, p['wo'])
    out = out * p['gamma'][None, :, None, None]
    return out + x


if __name__ == "__main__":
    # Small shapes consistent with the module.
    B, C, H, W = 2, 32, 16, 16
    num_heads, key_dim, value_dim = 2, 32, 32
    eps = 1e-5

    key = jax.random.PRNGKey(0)
    ks = jax.random.split(key, 11)

    x = jax.random.normal(ks[0], (B, C, H, W), dtype=jnp.float32)

    # BatchNorm2d (eval-mode) parameters, folded into scale/bias.
    bn_weight = jax.random.normal(ks[1], (C,), jnp.float32) * 0.1 + 1.0
    bn_bias_p = jax.random.normal(ks[2], (C,), jnp.float32) * 0.1
    run_mean = jax.random.normal(ks[3], (C,), jnp.float32) * 0.1
    run_var = jax.nn.softplus(jax.random.normal(ks[4], (C,), jnp.float32)) + 0.5
    bn_scale = bn_weight / jnp.sqrt(run_var + eps)
    bn_bias = bn_bias_p - run_mean * bn_scale

    # 1x1 conv weights stored as [in, out] matmul matrices.  gamma is the
    # learnable LayerScale parameter (init 1e-5 in the module); a non-trivial
    # value is used here so the bf16 attention branch is actually exercised by
    # the comparison instead of being hidden under the residual.
    params = {
        'bn_scale': bn_scale,
        'bn_bias': bn_bias,
        'wq': jax.random.normal(ks[5], (C, num_heads * key_dim), jnp.float32) * 0.05,
        'wk': jax.random.normal(ks[6], (C, key_dim), jnp.float32) * 0.05,
        'wv': jax.random.normal(ks[7], (C, key_dim), jnp.float32) * 0.05,
        'wo': jax.random.normal(ks[8], (num_heads * key_dim, C), jnp.float32) * 0.05,
        'gamma': jax.random.uniform(ks[9], (C,), jnp.float32, minval=0.1, maxval=0.5),
    }

    out = mha_self_attention_block(x, params, num_heads=num_heads, key_dim=key_dim)
    out = jax.block_until_ready(out)

    ref = reference(x, params, num_heads=num_heads, key_dim=key_dim)
    assert out.shape == (B, C, H, W)
    # bf16 MXU operands (f32 accumulation) -> loosened tolerance vs f32 ref.
    assert jnp.allclose(out, ref, atol=2e-2, rtol=2e-2), \
        float(jnp.max(jnp.abs(out - ref)))
    # Also check the attention branch itself (residual removed).
    assert jnp.allclose(out - x, ref - x, atol=2e-2), \
        float(jnp.max(jnp.abs((out - x) - (ref - x))))

    print("KERNEL_OK")
</pallas_src>

<mosaic_0001>
module attributes {stable_mosaic.version = 11 : i64} {
  func.func @_mqa_block_kernel(%arg0: i32, %arg1: memref<1x32x256xf32, #tpu.memory_space<vmem>>, %arg2: memref<128x32xbf16, #tpu.memory_space<vmem>>, %arg3: memref<128x1xf32, #tpu.memory_space<vmem>>, %arg4: memref<32x64xbf16, #tpu.memory_space<vmem>>, %arg5: memref<1x32x256xf32, #tpu.memory_space<vmem>>) attributes {dimension_semantics = [#tpu.dimension_semantics<parallel>], iteration_bounds = array<i64: 2>, scalar_prefetch = 0 : i64, scratch_operands = 0 : i64, tpu.core_type = #tpu.core_type<tc>, window_params = [{transform_indices = @transform_0, window_bounds = array<i64: 1, 32, 256>}, {pipeline_mode = #tpu.pipeline_mode<synchronous>, transform_indices = @transform_1, window_bounds = array<i64: 128, 32>}, {pipeline_mode = #tpu.pipeline_mode<synchronous>, transform_indices = @transform_2, window_bounds = array<i64: 128, 1>}, {pipeline_mode = #tpu.pipeline_mode<synchronous>, transform_indices = @transform_3, window_bounds = array<i64: 32, 64>}, {transform_indices = @transform_4, window_bounds = array<i64: 1, 32, 256>}]} {
    %c0 = arith.constant 0 : index
    %c0_0 = arith.constant 0 : index
    %c0_1 = arith.constant 0 : index
    %0 = vector.load %arg1[%c0, %c0_0, %c0_1] : memref<1x32x256xf32, #tpu.memory_space<vmem>>, vector<1x32x256xf32>
    %1 = vector.shape_cast %0 : vector<1x32x256xf32> to vector<32x256xf32>
    %2 = arith.truncf %1 : vector<32x256xf32> to vector<32x256xbf16>
    %c0_2 = arith.constant 0 : index
    %c0_3 = arith.constant 0 : index
    %3 = vector.load %arg2[%c0_2, %c0_3] : memref<128x32xbf16, #tpu.memory_space<vmem>>, vector<128x32xbf16>
    %cst = arith.constant dense<0.000000e+00> : vector<128x256xf32>
    %4 = tpu.matmul %3, %2, %cst {dimension_numbers = #tpu.dot_dimension_numbers<[1], [0], [0], [1], [0, 0, 1, 1], [], []>} : vector<128x32xbf16>, vector<32x256xbf16>, vector<128x256xf32> -> vector<128x256xf32>
    %c0_4 = arith.constant 0 : index
    %c0_5 = arith.constant 0 : index
    %5 = vector.load %arg3[%c0_4, %c0_5] : memref<128x1xf32, #tpu.memory_space<vmem>>, vector<128x1xf32>
    %6 = vector.broadcast %5 : vector<128x1xf32> to vector<128x256xf32>
    %7 = arith.addf %4, %6 : vector<128x256xf32>
    %8 = vector.extract_strided_slice %7 {offsets = [64, 0], sizes = [32, 256], strides = [1, 1]} : vector<128x256xf32> to vector<32x256xf32>
    %9 = tpu.transpose %8, [1, 0] : vector<32x256xf32> -> vector<256x32xf32>
    %10 = arith.truncf %9 : vector<256x32xf32> to vector<256x32xbf16>
    %11 = vector.extract_strided_slice %7 {offsets = [96, 0], sizes = [32, 256], strides = [1, 1]} : vector<128x256xf32> to vector<32x256xf32>
    %12 = arith.truncf %11 : vector<32x256xf32> to vector<32x256xbf16>
    %13 = vector.extract_strided_slice %7 {offsets = [0, 0], sizes = [32, 256], strides = [1, 1]} : vector<128x256xf32> to vector<32x256xf32>
    %14 = arith.truncf %13 : vector<32x256xf32> to vector<32x256xbf16>
    %cst_6 = arith.constant dense<0.000000e+00> : vector<256x256xf32>
    %15 = tpu.matmul %10, %14, %cst_6 {dimension_numbers = #tpu.dot_dimension_numbers<[1], [0], [0], [1], [0, 0, 1, 1], [], []>} : vector<256x32xbf16>, vector<32x256xbf16>, vector<256x256xf32> -> vector<256x256xf32>
    %cst_7 = arith.constant dense<0xFF800000> : vector<256xf32>
    %16 = vector.multi_reduction <maximumf>, %15, %cst_7 [0] : vector<256x256xf32> to vector<256xf32>
    %17 = vector.shape_cast %16 : vector<256xf32> to vector<1x256xf32>
    %18 = vector.broadcast %17 : vector<1x256xf32> to vector<256x256xf32>
    %19 = arith.subf %15, %18 : vector<256x256xf32>
    %20 = math.exp %19 : vector<256x256xf32>
    %cst_8 = arith.constant dense<0.000000e+00> : vector<256xf32>
    %21 = vector.multi_reduction <add>, %20, %cst_8 [0] : vector<256x256xf32> to vector<256xf32>
    %22 = vector.shape_cast %21 : vector<256xf32> to vector<1x256xf32>
    %23 = tpu.reciprocal %22 {approx = true} : vector<1x256xf32> -> vector<1x256xf32>
    %24 = arith.truncf %20 : vector<256x256xf32> to vector<256x256xbf16>
    %cst_9 = arith.constant dense<0.000000e+00> : vector<32x256xf32>
    %25 = tpu.matmul %12, %24, %cst_9 {dimension_numbers = #tpu.dot_dimension_numbers<[1], [0], [0], [1], [0, 0, 1, 1], [], []>} : vector<32x256xbf16>, vector<256x256xbf16>, vector<32x256xf32> -> vector<32x256xf32>
    %26 = vector.broadcast %23 : vector<1x256xf32> to vector<32x256xf32>
    %27 = arith.mulf %25, %26 : vector<32x256xf32>
    %28 = vector.extract_strided_slice %7 {offsets = [32, 0], sizes = [32, 256], strides = [1, 1]} : vector<128x256xf32> to vector<32x256xf32>
    %29 = arith.truncf %28 : vector<32x256xf32> to vector<32x256xbf16>
    %cst_10 = arith.constant dense<0.000000e+00> : vector<256x256xf32>
    %30 = tpu.matmul %10, %29, %cst_10 {dimension_numbers = #tpu.dot_dimension_numbers<[1], [0], [0], [1], [0, 0, 1, 1], [], []>} : vector<256x32xbf16>, vector<32x256xbf16>, vector<256x256xf32> -> vector<256x256xf32>
    %cst_11 = arith.constant dense<0xFF800000> : vector<256xf32>
    %31 = vector.multi_reduction <maximumf>, %30, %cst_11 [0] : vector<256x256xf32> to vector<256xf32>
    %32 = vector.shape_cast %31 : vector<256xf32> to vector<1x256xf32>
    %33 = vector.broadcast %32 : vector<1x256xf32> to vector<256x256xf32>
    %34 = arith.subf %30, %33 : vector<256x256xf32>
    %35 = math.exp %34 : vector<256x256xf32>
    %cst_12 = arith.constant dense<0.000000e+00> : vector<256xf32>
    %36 = vector.multi_reduction <add>, %35, %cst_12 [0] : vector<256x256xf32> to vector<256xf32>
    %37 = vector.shape_cast %36 : vector<256xf32> to vector<1x256xf32>
    %38 = tpu.reciprocal %37 {approx = true} : vector<1x256xf32> -> vector<1x256xf32>
    %39 = arith.truncf %35 : vector<256x256xf32> to vector<256x256xbf16>
    %cst_13 = arith.constant dense<0.000000e+00> : vector<32x256xf32>
    %40 = tpu.matmul %12, %39, %cst_13 {dimension_numbers = #tpu.dot_dimension_numbers<[1], [0], [0], [1], [0, 0, 1, 1], [], []>} : vector<32x256xbf16>, vector<256x256xbf16>, vector<32x256xf32> -> vector<32x256xf32>
    %41 = vector.broadcast %38 : vector<1x256xf32> to vector<32x256xf32>
    %42 = arith.mulf %40, %41 : vector<32x256xf32>
    %43 = tpu.concatenate %27, %42 in 0 : vector<32x256xf32>, vector<32x256xf32> -> vector<64x256xf32>
    %44 = arith.truncf %43 : vector<64x256xf32> to vector<64x256xbf16>
    %c0_14 = arith.constant 0 : index
    %c0_15 = arith.constant 0 : index
    %45 = vector.load %arg4[%c0_14, %c0_15] : memref<32x64xbf16, #tpu.memory_space<vmem>>, vector<32x64xbf16>
    %cst_16 = arith.constant dense<0.000000e+00> : vector<32x256xf32>
    %46 = tpu.matmul %45, %44, %cst_16 {dimension_numbers = #tpu.dot_dimension_numbers<[1], [0], [0], [1], [0, 0, 1, 1], [], []>} : vector<32x64xbf16>, vector<64x256xbf16>, vector<32x256xf32> -> vector<32x256xf32>
    %47 = arith.addf %46, %1 : vector<32x256xf32>
    %c0_17 = arith.constant 0 : index
    %c0_18 = arith.constant 0 : index
    %c0_19 = arith.constant 0 : index
    %48 = vector.load %arg5[%c0_17, %c0_18, %c0_19] : memref<1x32x256xf32, #tpu.memory_space<vmem>>, vector<1x32x256xf32>
    %49 = vector.shape_cast %48 : vector<1x32x256xf32> to vector<32x256xf32>
    %50 = vector.shape_cast %47 : vector<32x256xf32> to vector<1x32x256xf32>
    tpu.vector_store %arg5[%c0_17, %c0_18, %c0_19], %50 {strides = array<i32>} : memref<1x32x256xf32, #tpu.memory_space<vmem>>, vector<1x32x256xf32>,
    return
  }
  func.func @transform_0(%arg0: i32) -> (i32, i32, i32) {
    %c0_i32 = arith.constant 0 : i32
    %c0_i32_0 = arith.constant 0 : i32
    %c0_i32_1 = arith.constant 0 : i32
    return %arg0, %c0_i32, %c0_i32_0 : i32, i32, i32
  }
  func.func @transform_1(%arg0: i32) -> (i32, i32) {
    %c0_i32 = arith.constant 0 : i32
    %c0_i32_0 = arith.constant 0 : i32
    %c0_i32_1 = arith.constant 0 : i32
    return %c0_i32, %c0_i32_0 : i32, i32
  }
  func.func @transform_2(%arg0: i32) -> (i32, i32) {
    %c0_i32 = arith.constant 0 : i32
    %c0_i32_0 = arith.constant 0 : i32
    %c0_i32_1 = arith.constant 0 : i32
    return %c0_i32, %c0_i32_0 : i32, i32
  }
  func.func @transform_3(%arg0: i32) -> (i32, i32) {
    %c0_i32 = arith.constant 0 : i32
    %c0_i32_0 = arith.constant 0 : i32
    %c0_i32_1 = arith.constant 0 : i32
    return %c0_i32, %c0_i32_0 : i32, i32
  }
  func.func @transform_4(%arg0: i32) -> (i32, i32, i32) {
    %c0_i32 = arith.constant 0 : i32
    %c0_i32_0 = arith.constant 0 : i32
    %c0_i32_1 = arith.constant 0 : i32
    return %arg0, %c0_i32, %c0_i32_0 : i32, i32, i32
  }
}

</mosaic_0001>

<llo_original>
// kernel: tpu_custom_call.1
$region0: #{tpu_custom_call.1}
  #allocation0 [shape = 'u32[]', space=smem, size = 0x4, offset = 0x4, fixed_abs, tag = 'smem constant byte address 0x4 - core index']
  #allocation1 [shape = 'u32[144,128]{1,0:T(1,128)}', space=vmem, size = 0x12000, scoped, tag = 'internal scratch']
  %s0 = inlined_call_operand.vmem [shape: f32[2,32,256], index: 0, kind: input, shape index: {}]
  %s1 = inlined_call_operand.vmem [shape: bf16[128,32], index: 1, kind: input, shape index: {}]
  %s2 = inlined_call_operand.vmem [shape: f32[128,1], index: 2, kind: input, shape index: {}]
  %s3 = inlined_call_operand.vmem [shape: bf16[32,64], index: 3, kind: input, shape index: {}]
  %s4 = inlined_call_operand.hbm [shape: f32[2,32,256], index: 4, kind: output, shape index: {}]
  %s5 = sld [smem:[#allocation0]]
  $region49: #{tpu_custom_call.1} parent=0
    _
  %s7 = ssub.s32 1, %s5
  %s8 = scalar_select 0, %s7, %s5
  $region1: #{tpu_custom_call.1} parent=0
    #allocation2 [shape = 'u8[65536]{0}', space=vmem, size = 0x10000, scoped, tag = 'output window, operand 0']
    #allocation3 [shape = 's32[2]{0}', space=sflag, size = 0x8, scoped, tag = 'scoped memory for tpu_custom_call.1']
    %9 = vsyncpa [#allocation3], 0
    %s10 = scalar_lea.sflag [#allocation3], 1
    %11 = vsyncpa %s10, 0
    loop: start=0, step=1, limit=4
    $region2: #{tpu_custom_call.1} parent=1 // loop_pre_header
      _
    $region3: #{tpu_custom_call.1} parent=1 // loop_header
      %s13 = sphi 0, %s17
      %p14 = scmp.ge.s32.totalorder %s13, 4
      %s23 = sphi 0, %s25
      %s26 = sphi 0, %s23
      %s27 = sphi 0, %s26
      %s43 = sphi 0, %s27
      %s47 = sphi 0, %s47
      %s49 = sphi 0, %s47
      %s50 = sphi 0, %s49
      %s64 = sphi 0, %s50
      %s68 = sphi 0, %s68
      %s70 = sphi 0, %s68
      %s71 = sphi 0, %s70
      %s85 = sphi 0, %s71
      %s89 = sphi 0, %s89
      %s91 = sphi 0, %s89
      %s92 = sphi 0, %s91
      %s106 = sphi 0, %s92
      %s112 = sphi 0, %s114
      %s115 = sphi 0, %s112
      %s116 = sphi 0, %s115
      %s132 = sphi 0, %s116
    $region4: #{tpu_custom_call.1} parent=1 // loop_header_branch
      %16 = sbr.rel (%p14) target = $region8
    $region5: #{tpu_custom_call.1} parent=1 // loop_body
      %s18 = ssub.s32 %s13, 1
      %s19 = ssub.s32 %s13, 2
      %s20 = sadd.s32 %s13, 1
      %s21 = ssub.s32 %s13, %s20
      %p22 = scmp.eq.s32.totalorder %s21, 0
      %s24 = sadd.s32 %s23, 1
      %s25 = scalar_select %p22, %s23, %s24
      %p28 = pneg %p22
      %p29 = scmp.eq.s32.totalorder %s13, 1
      %p30 = por %p28, %p29
      %p31 = scmp.ne.s32.totalorder %s23, %s26
      %p32 = scmp.eq.s32.totalorder %s13, 0
      %p33 = por %p31, %p32
      %p34 = scmp.ne.s32.totalorder %s23, %s26
      %p35 = scmp.eq.s32.totalorder %s18, 1
      %p36 = por %p34, %p35
      %p37 = scmp.ne.s32.totalorder %s26, %s27
      %p38 = scmp.eq.s32.totalorder %s18, 0
      %p39 = por %p37, %p38
      %p40 = scmp.ne.s32.totalorder %s26, %s27
      %p41 = scmp.eq.s32.totalorder %s19, 1
      %p42 = por %p40, %p41
      %p44 = scmp.ne.s32.totalorder %s27, %s43
      %p45 = scmp.eq.s32.totalorder %s19, 0
      %p46 = por %p44, %p45
      %s48 = sadd.s32 %s47, 1
      %p51 = scmp.eq.s32.totalorder %s13, 1
      %p52 = scmp.ne.s32.totalorder %s47, %s49
      %p53 = scmp.eq.s32.totalorder %s13, 0
      %p54 = por %p52, %p53
      %p55 = scmp.ne.s32.totalorder %s47, %s49
      %p56 = scmp.eq.s32.totalorder %s18, 1
      %p57 = por %p55, %p56
      %p58 = scmp.ne.s32.totalorder %s49, %s50
      %p59 = scmp.eq.s32.totalorder %s18, 0
      %p60 = por %p58, %p59
      %p61 = scmp.ne.s32.totalorder %s49, %s50
      %p62 = scmp.eq.s32.totalorder %s19, 1
      %p63 = por %p61, %p62
      %p65 = scmp.ne.s32.totalorder %s50, %s64
      %p66 = scmp.eq.s32.totalorder %s19, 0
      %p67 = por %p65, %p66
      %s69 = sadd.s32 %s68, 1
      %p72 = scmp.eq.s32.totalorder %s13, 1
      %p73 = scmp.ne.s32.totalorder %s68, %s70
      %p74 = scmp.eq.s32.totalorder %s13, 0
      %p75 = por %p73, %p74
      %p76 = scmp.ne.s32.totalorder %s68, %s70
      %p77 = scmp.eq.s32.totalorder %s18, 1
      %p78 = por %p76, %p77
      %p79 = scmp.ne.s32.totalorder %s70, %s71
      %p80 = scmp.eq.s32.totalorder %s18, 0
      %p81 = por %p79, %p80
      %p82 = scmp.ne.s32.totalorder %s70, %s71
      %p83 = scmp.eq.s32.totalorder %s19, 1
      %p84 = por %p82, %p83
      %p86 = scmp.ne.s32.totalorder %s71, %s85
      %p87 = scmp.eq.s32.totalorder %s19, 0
      %p88 = por %p86, %p87
      %s90 = sadd.s32 %s89, 1
      %p93 = scmp.eq.s32.totalorder %s13, 1
      %p94 = scmp.ne.s32.totalorder %s89, %s91
      %p95 = scmp.eq.s32.totalorder %s13, 0
      %p96 = por %p94, %p95
      %p97 = scmp.ne.s32.totalorder %s89, %s91
      %p98 = scmp.eq.s32.totalorder %s18, 1
      %p99 = por %p97, %p98
      %p100 = scmp.ne.s32.totalorder %s91, %s92
      %p101 = scmp.eq.s32.totalorder %s18, 0
      %p102 = por %p100, %p101
      %p103 = scmp.ne.s32.totalorder %s91, %s92
      %p104 = scmp.eq.s32.totalorder %s19, 1
      %p105 = por %p103, %p104
      %p107 = scmp.ne.s32.totalorder %s92, %s106
      %p108 = scmp.eq.s32.totalorder %s19, 0
      %p109 = por %p107, %p108
      %s110 = ssub.s32 %s13, %s20
      %p111 = scmp.eq.s32.totalorder %s110, 0
      %s113 = sadd.s32 %s112, 1
      %s114 = scalar_select %p111, %s112, %s113
      %p117 = pneg %p111
      %p118 = scmp.eq.s32.totalorder %s13, 1
      %p119 = por %p117, %p118
      %p120 = scmp.ne.s32.totalorder %s112, %s115
      %p121 = scmp.eq.s32.totalorder %s13, 0
      %p122 = por %p120, %p121
      %p123 = scmp.ne.s32.totalorder %s112, %s115
      %p124 = scmp.eq.s32.totalorder %s18, 1
      %p125 = por %p123, %p124
      %p126 = scmp.ne.s32.totalorder %s115, %s116
      %p127 = scmp.eq.s32.totalorder %s18, 0
      %p128 = por %p126, %p127
      %p129 = scmp.ne.s32.totalorder %s115, %s116
      %p130 = scmp.eq.s32.totalorder %s19, 1
      %p131 = por %p129, %p130
      %p133 = scmp.ne.s32.totalorder %s116, %s132
      %p134 = scmp.eq.s32.totalorder %s19, 0
      %p135 = por %p133, %p134
      %p136 = scmp.le.s32.totalorder 1, %s13
      %p137 = scmp.lt.s32.totalorder %s13, 3
      %p138 = pnand %p136, %p137
      %p139 = pneg %p138
      // Predicated region
      $region9: #{tpu_custom_call.1} parent=5 // pred_check
        _
      $region10: #{tpu_custom_call.1} parent=5 // pred_check_branch
        %141 = sbr.rel (%p138) target = $region12
      $region11: #{tpu_custom_call.1} parent=5 // pred_region
        %s142 = ssub.s32 %s13, 1
        // Predicated region
        $region13: #{tpu_custom_call.1} parent=11 // pred_check
          %p143 = pneg %p60
        $region14: #{tpu_custom_call.1} parent=11 // pred_check_branch
          %145 = sbr.rel (%p143) target = $region16
        $region15: #{tpu_custom_call.1} parent=11 // pred_region
          _
        $region16: #{tpu_custom_call.1} parent=11 // pred_fallthru
          _
        // Predicated region
        $region17: #{tpu_custom_call.1} parent=11 // pred_check
          %p146 = pneg %p81
        $region18: #{tpu_custom_call.1} parent=11 // pred_check_branch
          %148 = sbr.rel (%p146) target = $region20
        $region19: #{tpu_custom_call.1} parent=11 // pred_region
          _
        $region20: #{tpu_custom_call.1} parent=11 // pred_fallthru
          _
        // Predicated region
        $region21: #{tpu_custom_call.1} parent=11 // pred_check
          %p149 = pneg %p102
        $region22: #{tpu_custom_call.1} parent=11 // pred_check_branch
          %151 = sbr.rel (%p149) target = $region24
        $region23: #{tpu_custom_call.1} parent=11 // pred_region
          _
        $region24: #{tpu_custom_call.1} parent=11 // pred_fallthru
          _
      $region12: #{tpu_custom_call.1} parent=5 // pred_fallthru
        _
      %p152 = scmp.lt.s32.totalorder %s13, 2
      // Predicated region
      $region25: #{tpu_custom_call.1} parent=5 // pred_check
        %p153 = pneg %p152
      $region26: #{tpu_custom_call.1} parent=5 // pred_check_branch
        %155 = sbr.rel (%p153) target = $region28
      $region27: #{tpu_custom_call.1} parent=5 // pred_region
        // Predicated region
        $region29: #{tpu_custom_call.1} parent=27 // pred_check
          %p156 = pneg %p33
        $region30: #{tpu_custom_call.1} parent=27 // pred_check_branch
          %158 = sbr.rel (%p156) target = $region32
        $region31: #{tpu_custom_call.1} parent=27 // pred_region
          %p159 = scmp.lt.s32.totalorder %s13, 1
          %s160 = scalar_select %p159, %s13, 1
          %s161 = smul.addr %s160, 8
          %s162 = smul.addr %s161, 8
          %s163 = scalar_lea.vmem %s0, %s162
        $region32: #{tpu_custom_call.1} parent=27 // pred_fallthru
          _
      $region28: #{tpu_custom_call.1} parent=5 // pred_fallthru
        _
      %p164 = scmp.le.s32.totalorder 1, %s13
      %p165 = scmp.lt.s32.totalorder %s13, 3
      %p166 = pnand %p164, %p165
      %p167 = pneg %p166
      // Predicated region
      $region33: #{tpu_custom_call.1} parent=5 // pred_check
        _
      $region34: #{tpu_custom_call.1} parent=5 // pred_check_branch
        %169 = sbr.rel (%p166) target = $region36
      $region35: #{tpu_custom_call.1} parent=5 // pred_region
        %s170 = ssub.s32 %s13, 1
        %p171 = scmp.lt.s32.totalorder %s18, 1
        %s172 = scalar_select %p171, %s18, 1
        %s173 = smul.addr %s172, 8
        %s174 = smul.addr %s173, 8
        %s175 = scalar_lea.vmem %s0, %s174
        %p176 = pneg %p39
        %p177 = pneg %p36
        %p178 = pneg %p60
        %p179 = pneg %p57
        %p180 = pneg %p81
        %p181 = pneg %p78
        %p182 = pneg %p102
        %p183 = pneg %p99
        %p184 = pneg %p128
        %p185 = pneg %p125
        %s186 = sand.u32 %s115, 1
        %s187 = scalar_lea.sflag [#allocation3], %s186
        %s188 = sand.u32 %s115, 1
        %s189 = smul.addr %s188, 64
        %s190 = scalar_lea.vmem [#allocation2], %s189
        %p191 = scmp.lt.s32.totalorder %s18, 1
        %s192 = scalar_select %p191, %s18, 1
        %s193 = smul.addr %s192, 8
        %s194 = smul.addr %s193, 8
        %s195 = scalar_lea.vmem %s0, %s194
        %v197 = vld [vmem:[%s195] sm:$0xff]
        %v198 = vld [vmem:[%s195 + $0x8] sm:$0xff]
        %v199 = vld [vmem:[%s195 + $0x10] sm:$0xff]
        %v200 = vld [vmem:[%s195 + $0x18] sm:$0xff]
        %v201 = vld [vmem:[%s195 + $0x20] sm:$0xff]
        %v202 = vld [vmem:[%s195 + $0x28] sm:$0xff]
        %v203 = vld [vmem:[%s195 + $0x30] sm:$0xff]
        %v204 = vld [vmem:[%s195 + $0x38] sm:$0xff]
        %v205 = vpack.c.bf16 %v199, %v197
        %v206 = vpack.c.bf16 %v200, %v198
        %v207 = vpack.c.bf16 %v203, %v201
        %v208 = vpack.c.bf16 %v204, %v202
        %v209 = vld [vmem:[%s1] sm:$0xf]
        %v210 = vld [vmem:[%s1 + $0x4] sm:$0xf]
        %v211 = vld [vmem:[%s1 + $0x8] sm:$0xf]
        %v212 = vld [vmem:[%s1 + $0xc] sm:$0xf]
        %v213 = vld [vmem:[%s1 + $0x10] sm:$0xf]
        %v214 = vld [vmem:[%s1 + $0x14] sm:$0xf]
        %v215 = vld [vmem:[%s1 + $0x18] sm:$0xf]
        %v216 = vld [vmem:[%s1 + $0x1c] sm:$0xf]
        %v217 = vld [vmem:[%s1 + $0x20] sm:$0xf]
        %v218 = vld [vmem:[%s1 + $0x24] sm:$0xf]
        %v219 = vld [vmem:[%s1 + $0x28] sm:$0xf]
        %v220 = vld [vmem:[%s1 + $0x2c] sm:$0xf]
        %v221 = vld [vmem:[%s1 + $0x30] sm:$0xf]
        %v222 = vld [vmem:[%s1 + $0x34] sm:$0xf]
        %v223 = vld [vmem:[%s1 + $0x38] sm:$0xf]
        %v224 = vld [vmem:[%s1 + $0x3c] sm:$0xf]
        %v225 = vld [vmem:[%s2] sm:$0xff]
        %v226 = vld [vmem:[%s2 + $0x8] sm:$0xff]
        %v227 = vld [vmem:[%s2 + $0x10] sm:$0xff]
        %v228 = vld [vmem:[%s2 + $0x18] sm:$0xff]
        %v229 = vld [vmem:[%s2 + $0x20] sm:$0xff]
        %v230 = vld [vmem:[%s2 + $0x28] sm:$0xff]
        %v231 = vld [vmem:[%s2 + $0x30] sm:$0xff]
        %v232 = vld [vmem:[%s2 + $0x38] sm:$0xff]
        %v233 = vld [vmem:[%s2 + $0x40] sm:$0xff]
        %v234 = vld [vmem:[%s2 + $0x48] sm:$0xff]
        %v235 = vld [vmem:[%s2 + $0x50] sm:$0xff]
        %v236 = vld [vmem:[%s2 + $0x58] sm:$0xff]
        %v237 = vld [vmem:[%s2 + $0x60] sm:$0xff]
        %v238 = vld [vmem:[%s2 + $0x68] sm:$0xff]
        %v239 = vld [vmem:[%s2 + $0x70] sm:$0xff]
        %v240 = vld [vmem:[%s2 + $0x78] sm:$0xff]
        %242 = vset.pattern.permute.xlu0 0
        %243 = vperm.xlu0 %242, %v225
        %v244 = vpop.permute.xlu0 %243
        %247 = vset.pattern.permute.xlu0 0
        %248 = vperm.xlu0 %247, %v226
        %v249 = vpop.permute.xlu0 %248
        %252 = vset.pattern.permute.xlu0 0
        %253 = vperm.xlu0 %252, %v227
        %v254 = vpop.permute.xlu0 %253
        %257 = vset.pattern.permute.xlu0 0
        %258 = vperm.xlu0 %257, %v228
        %v259 = vpop.permute.xlu0 %258
        %262 = vset.pattern.permute.xlu0 0
        %263 = vperm.xlu0 %262, %v229
        %v264 = vpop.permute.xlu0 %263
        %267 = vset.pattern.permute.xlu0 0
        %268 = vperm.xlu0 %267, %v230
        %v269 = vpop.permute.xlu0 %268
        %272 = vset.pattern.permute.xlu0 0
        %273 = vperm.xlu0 %272, %v231
        %v274 = vpop.permute.xlu0 %273
        %277 = vset.pattern.permute.xlu0 0
        %278 = vperm.xlu0 %277, %v232
        %v279 = vpop.permute.xlu0 %278
        %282 = vset.pattern.permute.xlu0 0
        %283 = vperm.xlu0 %282, %v233
        %v284 = vpop.permute.xlu0 %283
        %287 = vset.pattern.permute.xlu0 0
        %288 = vperm.xlu0 %287, %v234
        %v289 = vpop.permute.xlu0 %288
        %292 = vset.pattern.permute.xlu0 0
        %293 = vperm.xlu0 %292, %v235
        %v294 = vpop.permute.xlu0 %293
        %297 = vset.pattern.permute.xlu0 0
        %298 = vperm.xlu0 %297, %v236
        %v299 = vpop.permute.xlu0 %298
        %302 = vset.pattern.permute.xlu0 0
        %303 = vperm.xlu0 %302, %v237
        %v304 = vpop.permute.xlu0 %303
        %307 = vset.pattern.permute.xlu0 0
        %308 = vperm.xlu0 %307, %v238
        %v309 = vpop.permute.xlu0 %308
        %312 = vset.pattern.permute.xlu0 0
        %313 = vperm.xlu0 %312, %v239
        %v314 = vpop.permute.xlu0 %313
        %317 = vset.pattern.permute.xlu0 0
        %318 = vperm.xlu0 %317, %v240
        %v319 = vpop.permute.xlu0 %318
        %v337 = vunpack.c.l.b16 %v209
        %v338 = vunpack.c.l.b16 %v210
        %v339 = vunpack.c.l.b16 %v211
        %v340 = vunpack.c.l.b16 %v212
        %v341 = vunpack.c.l.b16 %v213
        %v342 = vunpack.c.l.b16 %v214
        %v343 = vunpack.c.l.b16 %v215
        %v344 = vunpack.c.l.b16 %v216
        %v345 = vunpack.c.l.b16 %v217
        %v346 = vunpack.c.l.b16 %v218
        %v347 = vunpack.c.l.b16 %v219
        %v348 = vunpack.c.l.b16 %v220
        %v349 = vunpack.c.l.b16 %v221
        %v350 = vunpack.c.l.b16 %v222
        %v351 = vunpack.c.l.b16 %v223
        %v352 = vunpack.c.l.b16 %v224
        %v353 = vpack.c.b16 %v338, %v337
        %v354 = vpack.c.b16 %v340, %v339
        %v355 = vpack.c.b16 %v342, %v341
        %v356 = vpack.c.b16 %v344, %v343
        %v357 = vpack.c.b16 %v346, %v345
        %v358 = vpack.c.b16 %v348, %v347
        %v359 = vpack.c.b16 %v350, %v349
        %v360 = vpack.c.b16 %v352, %v351
        %vm361 = vcmask 261120
        %v363 = vsel %vm361, %v353, 0
        %v366 = vsel %vm361, %v354, 0
        %v369 = vsel %vm361, %v355, 0
        %v372 = vsel %vm361, %v356, 0
        %v375 = vsel %vm361, %v357, 0
        %v378 = vsel %vm361, %v358, 0
        %v381 = vsel %vm361, %v359, 0
        %v384 = vsel %vm361, %v360, 0
        %386 = vmatprep.subr.bf16.mxu0 %v206
        %387 = vmatpush1.bf16.msra.mxu0 %v205
        %388 = vmatprep.subr.bf16.mxu0 %v208
        %389 = vmatpush1.bf16.msra.mxu0 %v207
        %390 = vmatprep.subr.bf16.mxu0 0
        %391 = vmatpush1.bf16.msra.mxu0 0
        %392 = vmatprep.subr.bf16.mxu0 0
        %393 = vmatpush1.bf16.msra.mxu0 0
        %394 = vmatprep.subr.bf16.mxu0 0
        %395 = vmatpush1.bf16.msra.mxu0 0
        %396 = vmatprep.subr.bf16.mxu0 0
        %397 = vmatpush1.bf16.msra.mxu0 0
        %398 = vmatprep.subr.bf16.mxu0 0
        %399 = vmatpush1.bf16.msra.mxu0 0
        %400 = vmatprep.subr.bf16.mxu0 0
        %401 = vmatpush1.bf16.msra.mxu0 0
        %402 = vmatprep.subr.bf16.mxu0 0
        %403 = vmatpush1.bf16.msra.mxu0 0
        %404 = vmatprep.subr.bf16.mxu0 0
        %405 = vmatpush1.bf16.msra.mxu0 0
        %406 = vmatprep.subr.bf16.mxu0 0
        %407 = vmatpush1.bf16.msra.mxu0 0
        %408 = vmatprep.subr.bf16.mxu0 0
        %409 = vmatpush1.bf16.msra.mxu0 0
        %410 = vmatprep.subr.bf16.mxu0 0
        %411 = vmatpush1.bf16.msra.mxu0 0
        %412 = vmatprep.subr.bf16.mxu0 0
        %413 = vmatpush1.bf16.msra.mxu0 0
        %414 = vmatprep.subr.bf16.mxu0 0
        %415 = vmatpush1.bf16.msra.mxu0 0
        %416 = vmatprep.subr.bf16.mxu0 0
        %417 = vmatpush1.bf16.msra.mxu0 0
        %418 = vmatprep.mubr.bf16.mxu0 0
        %419 = vmatmul.mubr.bf16.gmra.mrb[0].mxu0 %v363
        %v420 = vpop.f32.mrb[0].mxu0
        %v421 = vadd.f32 %v244, %v420
        %v422 = vpop.f32.mrb[0].mxu0
        %v423 = vadd.f32 %v244, %v422
        %v424 = vpop.f32.mrb[0].mxu0
        %v425 = vadd.f32 %v249, %v424
        %v426 = vpop.f32.mrb[0].mxu0
        %v427 = vadd.f32 %v249, %v426
        %428 = vmatprep.mubr.bf16.mxu0 0
        %429 = vmatmul.mubr.bf16.gmra.mrb[0].mxu0 %v366
        %v430 = vpop.f32.mrb[0].mxu0
        %v431 = vadd.f32 %v254, %v430
        %v432 = vpop.f32.mrb[0].mxu0
        %v433 = vadd.f32 %v254, %v432
        %v434 = vpop.f32.mrb[0].mxu0
        %v435 = vadd.f32 %v259, %v434
        %v436 = vpop.f32.mrb[0].mxu0
        %v437 = vadd.f32 %v259, %v436
        %438 = vmatprep.mubr.bf16.mxu0 0
        %439 = vmatmul.mubr.bf16.gmra.mrb[0].mxu0 %v369
        %v440 = vpop.f32.mrb[0].mxu0
        %v441 = vadd.f32 %v264, %v440
        %v442 = vpop.f32.mrb[0].mxu0
        %v443 = vadd.f32 %v264, %v442
        %v444 = vpop.f32.mrb[0].mxu0
        %v445 = vadd.f32 %v269, %v444
        %v446 = vpop.f32.mrb[0].mxu0
        %v447 = vadd.f32 %v269, %v446
        %448 = vmatprep.mubr.bf16.mxu0 0
        %449 = vmatmul.mubr.bf16.gmra.mrb[0].mxu0 %v372
        %v450 = vpop.f32.mrb[0].mxu0
        %v451 = vadd.f32 %v274, %v450
        %v452 = vpop.f32.mrb[0].mxu0
        %v453 = vadd.f32 %v274, %v452
        %v454 = vpop.f32.mrb[0].mxu0
        %v455 = vadd.f32 %v279, %v454
        %v456 = vpop.f32.mrb[0].mxu0
        %v457 = vadd.f32 %v279, %v456
        %458 = vmatprep.mubr.bf16.mxu0 0
        %459 = vmatmul.mubr.bf16.gmra.mrb[0].mxu0 %v375
        %v460 = vpop.f32.mrb[0].mxu0
        %v461 = vadd.f32 %v284, %v460
        %v462 = vpop.f32.mrb[0].mxu0
        %v463 = vadd.f32 %v284, %v462
        %v464 = vpop.f32.mrb[0].mxu0
        %v465 = vadd.f32 %v289, %v464
        %v466 = vpop.f32.mrb[0].mxu0
        %v467 = vadd.f32 %v289, %v466
        %468 = vmatprep.mubr.bf16.mxu0 0
        %469 = vmatmul.mubr.bf16.gmra.mrb[0].mxu0 %v378
        %v470 = vpop.f32.mrb[0].mxu0
        %v471 = vadd.f32 %v294, %v470
        %v472 = vpop.f32.mrb[0].mxu0
        %v473 = vadd.f32 %v294, %v472
        %v474 = vpop.f32.mrb[0].mxu0
        %v475 = vadd.f32 %v299, %v474
        %v476 = vpop.f32.mrb[0].mxu0
        %v477 = vadd.f32 %v299, %v476
        %478 = vmatprep.mubr.bf16.mxu0 0
        %479 = vmatmul.mubr.bf16.gmra.mrb[0].mxu0 %v381
        %v480 = vpop.f32.mrb[0].mxu0
        %v481 = vadd.f32 %v304, %v480
        %v482 = vpop.f32.mrb[0].mxu0
        %v483 = vadd.f32 %v304, %v482
        %v484 = vpop.f32.mrb[0].mxu0
        %v485 = vadd.f32 %v309, %v484
        %v486 = vpop.f32.mrb[0].mxu0
        %v487 = vadd.f32 %v309, %v486
        %488 = vmatprep.mubr.bf16.mxu0 0
        %489 = vmatmul.mubr.bf16.gmra.mrb[0].mxu0 %v384
        %v490 = vpop.f32.mrb[0].mxu0
        %v491 = vadd.f32 %v314, %v490
        %v492 = vpop.f32.mrb[0].mxu0
        %v493 = vadd.f32 %v314, %v492
        %v494 = vpop.f32.mrb[0].mxu0
        %v495 = vadd.f32 %v319, %v494
        %v496 = vpop.f32.mrb[0].mxu0
        %v497 = vadd.f32 %v319, %v496
        %498 = vdwg.mxu0
        %499 = vxpose.xlu0.b32.start [1/16] %v461, 128
        %500 = vxpose.xlu0.b32.cont [2/16] %v465, 128
        %501 = vxpose.xlu0.b32.cont [3/16] %v471, 128
        %502 = vxpose.xlu0.b32.cont [4/16] %v475, 128
        %503 = vxpose.xlu0.b32.cont [5/16] 0.0, 128
        %504 = vxpose.xlu0.b32.cont [6/16] 0.0, 128
        %505 = vxpose.xlu0.b32.cont [7/16] 0.0, 128
        %506 = vxpose.xlu0.b32.cont [8/16] 0.0, 128
        %507 = vxpose.xlu0.b32.cont [9/16] 0.0, 128
        %508 = vxpose.xlu0.b32.cont [10/16] 0.0, 128
        %509 = vxpose.xlu0.b32.cont [11/16] 0.0, 128
        %510 = vxpose.xlu0.b32.cont [12/16] 0.0, 128
        %511 = vxpose.xlu0.b32.cont [13/16] 0.0, 128
        %512 = vxpose.xlu0.b32.cont [14/16] 0.0, 128
        %513 = vxpose.xlu0.b32.cont [15/16] 0.0, 128
        %514 = vxpose.xlu0.b32.end [16/16] 0.0, 128
        %v515 = vpop.trf.xlu0
        %v516 = vpop.trf.xlu0
        %v517 = vpop.trf.xlu0
        %v518 = vpop.trf.xlu0
        %v519 = vpop.trf.xlu0
        %v520 = vpop.trf.xlu0
        %v521 = vpop.trf.xlu0
        %v522 = vpop.trf.xlu0
        %v523 = vpop.trf.xlu0
        %v524 = vpop.trf.xlu0
        %v525 = vpop.trf.xlu0
        %v526 = vpop.trf.xlu0
        %v527 = vpop.trf.xlu0
        %v528 = vpop.trf.xlu0
        %v529 = vpop.trf.xlu0
        %v530 = vpop.trf.xlu0
        %531 = vxpose.xlu0.b32.start [1/16] %v463, 128
        %532 = vxpose.xlu0.b32.cont [2/16] %v467, 128
        %533 = vxpose.xlu0.b32.cont [3/16] %v473, 128
        %534 = vxpose.xlu0.b32.cont [4/16] %v477, 128
        %535 = vxpose.xlu0.b32.cont [5/16] 0.0, 128
        %536 = vxpose.xlu0.b32.cont [6/16] 0.0, 128
        %537 = vxpose.xlu0.b32.cont [7/16] 0.0, 128
        %538 = vxpose.xlu0.b32.cont [8/16] 0.0, 128
        %539 = vxpose.xlu0.b32.cont [9/16] 0.0, 128
        %540 = vxpose.xlu0.b32.cont [10/16] 0.0, 128
        %541 = vxpose.xlu0.b32.cont [11/16] 0.0, 128
        %542 = vxpose.xlu0.b32.cont [12/16] 0.0, 128
        %543 = vxpose.xlu0.b32.cont [13/16] 0.0, 128
        %544 = vxpose.xlu0.b32.cont [14/16] 0.0, 128
        %545 = vxpose.xlu0.b32.cont [15/16] 0.0, 128
        %546 = vxpose.xlu0.b32.end [16/16] 0.0, 128
        %v547 = vpop.trf.xlu0
        %v548 = vpop.trf.xlu0
        %v549 = vpop.trf.xlu0
        %v550 = vpop.trf.xlu0
        %v551 = vpop.trf.xlu0
        %v552 = vpop.trf.xlu0
        %v553 = vpop.trf.xlu0
        %v554 = vpop.trf.xlu0
        %v555 = vpop.trf.xlu0
        %v556 = vpop.trf.xlu0
        %v557 = vpop.trf.xlu0
        %v558 = vpop.trf.xlu0
        %v559 = vpop.trf.xlu0
        %v560 = vpop.trf.xlu0
        %v561 = vpop.trf.xlu0
        %v562 = vpop.trf.xlu0
        %v563 = vpack.c.bf16 %v516, %v515
        %v564 = vpack.c.bf16 %v518, %v517
        %v565 = vpack.c.bf16 %v520, %v519
        %v566 = vpack.c.bf16 %v522, %v521
        %v567 = vpack.c.bf16 %v524, %v523
        %v568 = vpack.c.bf16 %v526, %v525
        %v569 = vpack.c.bf16 %v528, %v527
        %v570 = vpack.c.bf16 %v530, %v529
        %v571 = vpack.c.bf16 %v548, %v547
        %v572 = vpack.c.bf16 %v550, %v549
        %v573 = vpack.c.bf16 %v552, %v551
        %v574 = vpack.c.bf16 %v554, %v553
        %v575 = vpack.c.bf16 %v556, %v555
        %v576 = vpack.c.bf16 %v558, %v557
        %v577 = vpack.c.bf16 %v560, %v559
        %v578 = vpack.c.bf16 %v562, %v561
        %v579 = vpack.c.bf16 %v485, %v481
        %v580 = vpack.c.bf16 %v487, %v483
        %v581 = vpack.c.bf16 %v495, %v491
        %v582 = vpack.c.bf16 %v497, %v493
        %v583 = vpack.c.bf16 %v425, %v421
        %v584 = vpack.c.bf16 %v427, %v423
        %v585 = vpack.c.bf16 %v435, %v431
        %v586 = vpack.c.bf16 %v437, %v433
        %v588 = vsel %vm361, %v563, 0
        %v591 = vsel %vm361, %v564, 0
        %v594 = vsel %vm361, %v565, 0
        %v597 = vsel %vm361, %v566, 0
        %v600 = vsel %vm361, %v567, 0
        %v603 = vsel %vm361, %v568, 0
        %v606 = vsel %vm361, %v569, 0
        %v609 = vsel %vm361, %v570, 0
        %v612 = vsel %vm361, %v571, 0
        %v615 = vsel %vm361, %v572, 0
        %v618 = vsel %vm361, %v573, 0
        %v621 = vsel %vm361, %v574, 0
        %v624 = vsel %vm361, %v575, 0
        %v627 = vsel %vm361, %v576, 0
        %v630 = vsel %vm361, %v577, 0
        %v633 = vsel %vm361, %v578, 0
        %635 = vmatprep.subr.bf16.mxu0 %v584
        %636 = vmatpush1.bf16.msra.mxu0 %v583
        %637 = vmatprep.subr.bf16.mxu0 %v586
        %638 = vmatpush1.bf16.msra.mxu0 %v585
        %639 = vmatprep.subr.bf16.mxu0 0
        %640 = vmatpush1.bf16.msra.mxu0 0
        %641 = vmatprep.subr.bf16.mxu0 0
        %642 = vmatpush1.bf16.msra.mxu0 0
        %643 = vmatprep.subr.bf16.mxu0 0
        %644 = vmatpush1.bf16.msra.mxu0 0
        %645 = vmatprep.subr.bf16.mxu0 0
        %646 = vmatpush1.bf16.msra.mxu0 0
        %647 = vmatprep.subr.bf16.mxu0 0
        %648 = vmatpush1.bf16.msra.mxu0 0
        %649 = vmatprep.subr.bf16.mxu0 0
        %650 = vmatpush1.bf16.msra.mxu0 0
        %651 = vmatprep.subr.bf16.mxu0 0
        %652 = vmatpush1.bf16.msra.mxu0 0
        %653 = vmatprep.subr.bf16.mxu0 0
        %654 = vmatpush1.bf16.msra.mxu0 0
        %655 = vmatprep.subr.bf16.mxu0 0
        %656 = vmatpush1.bf16.msra.mxu0 0
        %657 = vmatprep.subr.bf16.mxu0 0
        %658 = vmatpush1.bf16.msra.mxu0 0
        %659 = vmatprep.subr.bf16.mxu0 0
        %660 = vmatpush1.bf16.msra.mxu0 0
        %661 = vmatprep.subr.bf16.mxu0 0
        %662 = vmatpush1.bf16.msra.mxu0 0
        %663 = vmatprep.subr.bf16.mxu0 0
        %664 = vmatpush1.bf16.msra.mxu0 0
        %665 = vmatprep.subr.bf16.mxu0 0
        %666 = vmatpush1.bf16.msra.mxu0 0
        %667 = vmatprep.mubr.bf16.mxu0 0
        %668 = vmatmul.mubr.bf16.gmra.mrb[0].mxu0 %v588
        %v669 = vpop.f32.mrb[0].mxu0
        %v670 = vadd.f32 0.0, %v669
        %v671 = vpop.f32.mrb[0].mxu0
        %v672 = vadd.f32 0.0, %v671
        %v673 = vpop.f32.mrb[0].mxu0
        %v674 = vadd.f32 0.0, %v673
        %v675 = vpop.f32.mrb[0].mxu0
        %v676 = vadd.f32 0.0, %v675
        %677 = vmatprep.mubr.bf16.mxu0 0
        %678 = vmatmul.mubr.bf16.gmra.mrb[0].mxu0 %v591
        %v679 = vpop.f32.mrb[0].mxu0
        %v680 = vadd.f32 0.0, %v679
        %v681 = vpop.f32.mrb[0].mxu0
        %v682 = vadd.f32 0.0, %v681
        %v683 = vpop.f32.mrb[0].mxu0
        %v684 = vadd.f32 0.0, %v683
        %v685 = vpop.f32.mrb[0].mxu0
        %v686 = vadd.f32 0.0, %v685
        %687 = vmatprep.mubr.bf16.mxu0 0
        %688 = vmatmul.mubr.bf16.gmra.mrb[0].mxu0 %v594
        %v689 = vpop.f32.mrb[0].mxu0
        %v690 = vadd.f32 0.0, %v689
        %v691 = vpop.f32.mrb[0].mxu0
        %v692 = vadd.f32 0.0, %v691
        %v693 = vpop.f32.mrb[0].mxu0
        %v694 = vadd.f32 0.0, %v693
        %v695 = vpop.f32.mrb[0].mxu0
        %v696 = vadd.f32 0.0, %v695
        %697 = vmatprep.mubr.bf16.mxu0 0
        %698 = vmatmul.mubr.bf16.gmra.mrb[0].mxu0 %v597
        %v699 = vpop.f32.mrb[0].mxu0
        %v700 = vadd.f32 0.0, %v699
        %v701 = vpop.f32.mrb[0].mxu0
        %v702 = vadd.f32 0.0, %v701
        %v703 = vpop.f32.mrb[0].mxu0
        %v704 = vadd.f32 0.0, %v703
        %v705 = vpop.f32.mrb[0].mxu0
        %v706 = vadd.f32 0.0, %v705
        %707 = vmatprep.mubr.bf16.mxu0 0
        %708 = vmatmul.mubr.bf16.gmra.mrb[0].mxu0 %v600
        %v709 = vpop.f32.mrb[0].mxu0
        %v710 = vadd.f32 0.0, %v709
        %v711 = vpop.f32.mrb[0].mxu0
        %v712 = vadd.f32 0.0, %v711
        %v713 = vpop.f32.mrb[0].mxu0
        %v714 = vadd.f32 0.0, %v713
        %v715 = vpop.f32.mrb[0].mxu0
        %v716 = vadd.f32 0.0, %v715
        %717 = vmatprep.mubr.bf16.mxu0 0
        %718 = vmatmul.mubr.bf16.gmra.mrb[0].mxu0 %v603
        %v719 = vpop.f32.mrb[0].mxu0
        %v720 = vadd.f32 0.0, %v719
        %v721 = vpop.f32.mrb[0].mxu0
        %v722 = vadd.f32 0.0, %v721
        %v723 = vpop.f32.mrb[0].mxu0
        %v724 = vadd.f32 0.0, %v723
        %v725 = vpop.f32.mrb[0].mxu0
        %v726 = vadd.f32 0.0, %v725
        %727 = vmatprep.mubr.bf16.mxu0 0
        %728 = vmatmul.mubr.bf16.gmra.mrb[0].mxu0 %v606
        %v729 = vpop.f32.mrb[0].mxu0
        %v730 = vadd.f32 0.0, %v729
        %v731 = vpop.f32.mrb[0].mxu0
        %v732 = vadd.f32 0.0, %v731
        %v733 = vpop.f32.mrb[0].mxu0
        %v734 = vadd.f32 0.0, %v733
        %v735 = vpop.f32.mrb[0].mxu0
        %v736 = vadd.f32 0.0, %v735
        %737 = vmatprep.mubr.bf16.mxu0 0
        %738 = vmatmul.mubr.bf16.gmra.mrb[0].mxu0 %v609
        %v739 = vpop.f32.mrb[0].mxu0
        %v740 = vadd.f32 0.0, %v739
        %v741 = vpop.f32.mrb[0].mxu0
        %v742 = vadd.f32 0.0, %v741
        %v743 = vpop.f32.mrb[0].mxu0
        %v744 = vadd.f32 0.0, %v743
        %v745 = vpop.f32.mrb[0].mxu0
        %v746 = vadd.f32 0.0, %v745
        %747 = vmatprep.mubr.bf16.mxu0 0
        %748 = vmatmul.mubr.bf16.gmra.mrb[0].mxu0 %v612
        %v749 = vpop.f32.mrb[0].mxu0
        %v750 = vadd.f32 0.0, %v749
        %v751 = vpop.f32.mrb[0].mxu0
        %v752 = vadd.f32 0.0, %v751
        %v753 = vpop.f32.mrb[0].mxu0
        %v754 = vadd.f32 0.0, %v753
        %v755 = vpop.f32.mrb[0].mxu0
        %v756 = vadd.f32 0.0, %v755
        %757 = vmatprep.mubr.bf16.mxu0 0
        %758 = vmatmul.mubr.bf16.gmra.mrb[0].mxu0 %v615
        %v759 = vpop.f32.mrb[0].mxu0
        %v760 = vadd.f32 0.0, %v759
        %v761 = vpop.f32.mrb[0].mxu0
        %v762 = vadd.f32 0.0, %v761
        %v763 = vpop.f32.mrb[0].mxu0
        %v764 = vadd.f32 0.0, %v763
        %v765 = vpop.f32.mrb[0].mxu0
        %v766 = vadd.f32 0.0, %v765
        %767 = vmatprep.mubr.bf16.mxu0 0
        %768 = vmatmul.mubr.bf16.gmra.mrb[0].mxu0 %v618
        %v769 = vpop.f32.mrb[0].mxu0
        %v770 = vadd.f32 0.0, %v769
        %v771 = vpop.f32.mrb[0].mxu0
        %v772 = vadd.f32 0.0, %v771
        %v773 = vpop.f32.mrb[0].mxu0
        %v774 = vadd.f32 0.0, %v773
        %v775 = vpop.f32.mrb[0].mxu0
        %v776 = vadd.f32 0.0, %v775
        %777 = vmatprep.mubr.bf16.mxu0 0
        %778 = vmatmul.mubr.bf16.gmra.mrb[0].mxu0 %v621
        %v779 = vpop.f32.mrb[0].mxu0
        %v780 = vadd.f32 0.0, %v779
        %v781 = vpop.f32.mrb[0].mxu0
        %v782 = vadd.f32 0.0, %v781
        %v783 = vpop.f32.mrb[0].mxu0
        %v784 = vadd.f32 0.0, %v783
        %v785 = vpop.f32.mrb[0].mxu0
        %v786 = vadd.f32 0.0, %v785
        %787 = vmatprep.mubr.bf16.mxu0 0
        %788 = vmatmul.mubr.bf16.gmra.mrb[0].mxu0 %v624
        %v789 = vpop.f32.mrb[0].mxu0
        %v790 = vadd.f32 0.0, %v789
        %v791 = vpop.f32.mrb[0].mxu0
        %v792 = vadd.f32 0.0, %v791
        %v793 = vpop.f32.mrb[0].mxu0
        %v794 = vadd.f32 0.0, %v793
        %v795 = vpop.f32.mrb[0].mxu0
        %v796 = vadd.f32 0.0, %v795
        %797 = vmatprep.mubr.bf16.mxu0 0
        %798 = vmatmul.mubr.bf16.gmra.mrb[0].mxu0 %v627
        %v799 = vpop.f32.mrb[0].mxu0
        %v800 = vadd.f32 0.0, %v799
        %v801 = vpop.f32.mrb[0].mxu0
        %v802 = vadd.f32 0.0, %v801
        %v803 = vpop.f32.mrb[0].mxu0
        %v804 = vadd.f32 0.0, %v803
        %v805 = vpop.f32.mrb[0].mxu0
        %v806 = vadd.f32 0.0, %v805
        %807 = vmatprep.mubr.bf16.mxu0 0
        %808 = vmatmul.mubr.bf16.gmra.mrb[0].mxu0 %v630
        %v809 = vpop.f32.mrb[0].mxu0
        %v810 = vadd.f32 0.0, %v809
        %v811 = vpop.f32.mrb[0].mxu0
        %v812 = vadd.f32 0.0, %v811
        %v813 = vpop.f32.mrb[0].mxu0
        %v814 = vadd.f32 0.0, %v813
        %v815 = vpop.f32.mrb[0].mxu0
        %v816 = vadd.f32 0.0, %v815
        %817 = vmatprep.mubr.bf16.mxu0 0
        %818 = vmatmul.mubr.bf16.gmra.mrb[0].mxu0 %v633
        %v819 = vpop.f32.mrb[0].mxu0
        %v820 = vadd.f32 0.0, %v819
        %v821 = vpop.f32.mrb[0].mxu0
        %v822 = vadd.f32 0.0, %v821
        %v823 = vpop.f32.mrb[0].mxu0
        %v824 = vadd.f32 0.0, %v823
        %v825 = vpop.f32.mrb[0].mxu0
        %v826 = vadd.f32 0.0, %v825
        %827 = vdwg.mxu0
        %v828 = vmax.f32 %v670, %v680
        %v829 = vmax.f32 %v674, %v684
        %v830 = vmax.f32 %v828, %v690
        %v831 = vmax.f32 %v829, %v694
        %v832 = vmax.f32 %v830, %v700
        %v833 = vmax.f32 %v831, %v704
        %v834 = vmax.f32 %v832, %v710
        %v835 = vmax.f32 %v833, %v714
        %v836 = vmax.f32 %v834, %v720
        %v837 = vmax.f32 %v835, %v724
        %v838 = vmax.f32 %v836, %v730
        %v839 = vmax.f32 %v837, %v734
        %v840 = vmax.f32 %v838, %v740
        %v841 = vmax.f32 %v839, %v744
        %v842 = vmax.f32 %v840, %v750
        %v843 = vmax.f32 %v841, %v754
        %v844 = vmax.f32 %v842, %v760
        %v845 = vmax.f32 %v843, %v764
        %v846 = vmax.f32 %v844, %v770
        %v847 = vmax.f32 %v845, %v774
        %v848 = vmax.f32 %v846, %v780
        %v849 = vmax.f32 %v847, %v784
        %v850 = vmax.f32 %v848, %v790
        %v851 = vmax.f32 %v849, %v794
        %v852 = vmax.f32 %v850, %v800
        %v853 = vmax.f32 %v851, %v804
        %v854 = vmax.f32 %v852, %v810
        %v855 = vmax.f32 %v853, %v814
        %v856 = vmax.f32 %v854, %v820
        %v857 = vmax.f32 %v855, %v824
        %v858 = vmax.f32 %v856, %v857
        %v859 = vrot.slane %v858, 4
        %v860 = vmax.f32 %v858, %v859
        %v861 = vrot.slane %v860, 2
        %v862 = vmax.f32 %v860, %v861
        %v863 = vrot.slane %v862, 1
        %v864 = vmax.f32 %v862, %v863
        %v865 = vmax.f32 %v672, %v682
        %v866 = vmax.f32 %v676, %v686
        %v867 = vmax.f32 %v865, %v692
        %v868 = vmax.f32 %v866, %v696
        %v869 = vmax.f32 %v867, %v702
        %v870 = vmax.f32 %v868, %v706
        %v871 = vmax.f32 %v869, %v712
        %v872 = vmax.f32 %v870, %v716
        %v873 = vmax.f32 %v871, %v722
        %v874 = vmax.f32 %v872, %v726
        %v875 = vmax.f32 %v873, %v732
        %v876 = vmax.f32 %v874, %v736
        %v877 = vmax.f32 %v875, %v742
        %v878 = vmax.f32 %v876, %v746
        %v879 = vmax.f32 %v877, %v752
        %v880 = vmax.f32 %v878, %v756
        %v881 = vmax.f32 %v879, %v762
        %v882 = vmax.f32 %v880, %v766
        %v883 = vmax.f32 %v881, %v772
        %v884 = vmax.f32 %v882, %v776
        %v885 = vmax.f32 %v883, %v782
        %v886 = vmax.f32 %v884, %v786
        %v887 = vmax.f32 %v885, %v792
        %v888 = vmax.f32 %v886, %v796
        %v889 = vmax.f32 %v887, %v802
        %v890 = vmax.f32 %v888, %v806
        %v891 = vmax.f32 %v889, %v812
        %v892 = vmax.f32 %v890, %v816
        %v893 = vmax.f32 %v891, %v822
        %v894 = vmax.f32 %v892, %v826
        %v895 = vmax.f32 %v893, %v894
        %v896 = vrot.slane %v895, 4
        %v897 = vmax.f32 %v895, %v896
        %v898 = vrot.slane %v897, 2
        %v899 = vmax.f32 %v897, %v898
        %v900 = vrot.slane %v899, 1
        %v901 = vmax.f32 %v899, %v900
        %v902 = vsub.f32 %v670, %v864
        %v903 = vsub.f32 %v672, %v901
        %v904 = vsub.f32 %v674, %v864
        %v905 = vsub.f32 %v676, %v901
        %v906 = vsub.f32 %v680, %v864
        %v907 = vsub.f32 %v682, %v901
        %v908 = vsub.f32 %v684, %v864
        %v909 = vsub.f32 %v686, %v901
        %v910 = vsub.f32 %v690, %v864
        %v911 = vsub.f32 %v692, %v901
        %v912 = vsub.f32 %v694, %v864
        %v913 = vsub.f32 %v696, %v901
        %v914 = vsub.f32 %v700, %v864
        %v915 = vsub.f32 %v702, %v901
        %v916 = vsub.f32 %v704, %v864
        %v917 = vsub.f32 %v706, %v901
        %v918 = vsub.f32 %v710, %v864
        %v919 = vsub.f32 %v712, %v901
        %v920 = vsub.f32 %v714, %v864
        %v921 = vsub.f32 %v716, %v901
        %v922 = vsub.f32 %v720, %v864
        %v923 = vsub.f32 %v722, %v901
        %v924 = vsub.f32 %v724, %v864
        %v925 = vsub.f32 %v726, %v901
        %v926 = vsub.f32 %v730, %v864
        %v927 = vsub.f32 %v732, %v901
        %v928 = vsub.f32 %v734, %v864
        %v929 = vsub.f32 %v736, %v901
        %v930 = vsub.f32 %v740, %v864
        %v931 = vsub.f32 %v742, %v901
        %v932 = vsub.f32 %v744, %v864
        %v933 = vsub.f32 %v746, %v901
        %v934 = vsub.f32 %v750, %v864
        %v935 = vsub.f32 %v752, %v901
        %v936 = vsub.f32 %v754, %v864
        %v937 = vsub.f32 %v756, %v901
        %v938 = vsub.f32 %v760, %v864
        %v939 = vsub.f32 %v762, %v901
        %v940 = vsub.f32 %v764, %v864
        %v941 = vsub.f32 %v766, %v901
        %v942 = vsub.f32 %v770, %v864
        %v943 = vsub.f32 %v772, %v901
        %v944 = vsub.f32 %v774, %v864
        %v945 = vsub.f32 %v776, %v901
        %v946 = vsub.f32 %v780, %v864
        %v947 = vsub.f32 %v782, %v901
        %v948 = vsub.f32 %v784, %v864
        %v949 = vsub.f32 %v786, %v901
        %v950 = vsub.f32 %v790, %v864
        %v951 = vsub.f32 %v792, %v901
        %v952 = vsub.f32 %v794, %v864
        %v953 = vsub.f32 %v796, %v901
        %v954 = vsub.f32 %v800, %v864
        %v955 = vsub.f32 %v802, %v901
        %v956 = vsub.f32 %v804, %v864
        %v957 = vsub.f32 %v806, %v901
        %v958 = vsub.f32 %v810, %v864
        %v959 = vsub.f32 %v812, %v901
        %v960 = vsub.f32 %v814, %v864
        %v961 = vsub.f32 %v816, %v901
        %v962 = vsub.f32 %v820, %v864
        %v963 = vsub.f32 %v822, %v901
        %v964 = vsub.f32 %v824, %v864
        %v965 = vsub.f32 %v826, %v901
        %v966 = vmul.f32 %v902, 1.442695
        %v967 = vpow.pop %v966
        %v968 = vmul.f32 %v903, 1.442695
        %v969 = vpow.pop %v968
        %v970 = vmul.f32 %v904, 1.442695
        %v971 = vpow.pop %v970
        %v972 = vmul.f32 %v905, 1.442695
        %v973 = vpow.pop %v972
        %v974 = vmul.f32 %v906, 1.442695
        %v975 = vpow.pop %v974
        %v976 = vmul.f32 %v907, 1.442695
        %v977 = vpow.pop %v976
        %v978 = vmul.f32 %v908, 1.442695
        %v979 = vpow.pop %v978
        %v980 = vmul.f32 %v909, 1.442695
        %v981 = vpow.pop %v980
        %v982 = vmul.f32 %v910, 1.442695
        %v983 = vpow.pop %v982
        %v984 = vmul.f32 %v911, 1.442695
        %v985 = vpow.pop %v984
        %v986 = vmul.f32 %v912, 1.442695
        %v987 = vpow.pop %v986
        %v988 = vmul.f32 %v913, 1.442695
        %v989 = vpow.pop %v988
        %v990 = vmul.f32 %v914, 1.442695
        %v991 = vpow.pop %v990
        %v992 = vmul.f32 %v915, 1.442695
        %v993 = vpow.pop %v992
        %v994 = vmul.f32 %v916, 1.442695
        %v995 = vpow.pop %v994
        %v996 = vmul.f32 %v917, 1.442695
        %v997 = vpow.pop %v996
        %v998 = vmul.f32 %v918, 1.442695
        %v999 = vpow.pop %v998
        %v1000 = vmul.f32 %v919, 1.442695
        %v1001 = vpow.pop %v1000
        %v1002 = vmul.f32 %v920, 1.442695
        %v1003 = vpow.pop %v1002
        %v1004 = vmul.f32 %v921, 1.442695
        %v1005 = vpow.pop %v1004
        %v1006 = vmul.f32 %v922, 1.442695
        %v1007 = vpow.pop %v1006
        %v1008 = vmul.f32 %v923, 1.442695
        %v1009 = vpow.pop %v1008
        %v1010 = vmul.f32 %v924, 1.442695
        %v1011 = vpow.pop %v1010
        %v1012 = vmul.f32 %v925, 1.442695
        %v1013 = vpow.pop %v1012
        %v1014 = vmul.f32 %v926, 1.442695
        %v1015 = vpow.pop %v1014
        %v1016 = vmul.f32 %v927, 1.442695
        %v1017 = vpow.pop %v1016
        %v1018 = vmul.f32 %v928, 1.442695
        %v1019 = vpow.pop %v1018
        %v1020 = vmul.f32 %v929, 1.442695
        %v1021 = vpow.pop %v1020
        %v1022 = vmul.f32 %v930, 1.442695
        %v1023 = vpow.pop %v1022
        %v1024 = vmul.f32 %v931, 1.442695
        %v1025 = vpow.pop %v1024
        %v1026 = vmul.f32 %v932, 1.442695
        %v1027 = vpow.pop %v1026
        %v1028 = vmul.f32 %v933, 1.442695
        %v1029 = vpow.pop %v1028
        %v1030 = vmul.f32 %v934, 1.442695
        %v1031 = vpow.pop %v1030
        %v1032 = vmul.f32 %v935, 1.442695
        %v1033 = vpow.pop %v1032
        %v1034 = vmul.f32 %v936, 1.442695
        %v1035 = vpow.pop %v1034
        %v1036 = vmul.f32 %v937, 1.442695
        %v1037 = vpow.pop %v1036
        %v1038 = vmul.f32 %v938, 1.442695
        %v1039 = vpow.pop %v1038
        %v1040 = vmul.f32 %v939, 1.442695
        %v1041 = vpow.pop %v1040
        %v1042 = vmul.f32 %v940, 1.442695
        %v1043 = vpow.pop %v1042
        %v1044 = vmul.f32 %v941, 1.442695
        %v1045 = vpow.pop %v1044
        %v1046 = vmul.f32 %v942, 1.442695
        %v1047 = vpow.pop %v1046
        %v1048 = vmul.f32 %v943, 1.442695
        %v1049 = vpow.pop %v1048
        %v1050 = vmul.f32 %v944, 1.442695
        %v1051 = vpow.pop %v1050
        %v1052 = vmul.f32 %v945, 1.442695
        %v1053 = vpow.pop %v1052
        %v1054 = vmul.f32 %v946, 1.442695
        %v1055 = vpow.pop %v1054
        %v1056 = vmul.f32 %v947, 1.442695
        %v1057 = vpow.pop %v1056
        %v1058 = vmul.f32 %v948, 1.442695
        %v1059 = vpow.pop %v1058
        %v1060 = vmul.f32 %v949, 1.442695
        %v1061 = vpow.pop %v1060
        %v1062 = vmul.f32 %v950, 1.442695
        %v1063 = vpow.pop %v1062
        %v1064 = vmul.f32 %v951, 1.442695
        %v1065 = vpow.pop %v1064
        %v1066 = vmul.f32 %v952, 1.442695
        %v1067 = vpow.pop %v1066
        %v1068 = vmul.f32 %v953, 1.442695
        %v1069 = vpow.pop %v1068
        %v1070 = vmul.f32 %v954, 1.442695
        %v1071 = vpow.pop %v1070
        %v1072 = vmul.f32 %v955, 1.442695
        %v1073 = vpow.pop %v1072
        %v1074 = vmul.f32 %v956, 1.442695
        %v1075 = vpow.pop %v1074
        %v1076 = vmul.f32 %v957, 1.442695
        %v1077 = vpow.pop %v1076
        %v1078 = vmul.f32 %v958, 1.442695
        %v1079 = vpow.pop %v1078
        %v1080 = vmul.f32 %v959, 1.442695
        %v1081 = vpow.pop %v1080
        %v1082 = vmul.f32 %v960, 1.442695
        %v1083 = vpow.pop %v1082
        %v1084 = vmul.f32 %v961, 1.442695
        %v1085 = vpow.pop %v1084
        %v1086 = vmul.f32 %v962, 1.442695
        %v1087 = vpow.pop %v1086
        %v1088 = vmul.f32 %v963, 1.442695
        %v1089 = vpow.pop %v1088
        %v1090 = vmul.f32 %v964, 1.442695
        %v1091 = vpow.pop %v1090
        %v1092 = vmul.f32 %v965, 1.442695
        %v1093 = vpow.pop %v1092
        %v1094 = vadd.f32 %v967, %v971
        %v1095 = vadd.f32 %v1094, %v975
        %v1096 = vadd.f32 %v1095, %v979
        %v1097 = vadd.f32 %v1096, %v983
        %v1098 = vadd.f32 %v1097, %v987
        %v1099 = vadd.f32 %v1098, %v991
        %v1100 = vadd.f32 %v1099, %v995
        %v1101 = vadd.f32 %v1100, %v999
        %v1102 = vadd.f32 %v1101, %v1003
        %v1103 = vadd.f32 %v1102, %v1007
        %v1104 = vadd.f32 %v1103, %v1011
        %v1105 = vadd.f32 %v1104, %v1015
        %v1106 = vadd.f32 %v1105, %v1019
        %v1107 = vadd.f32 %v1106, %v1023
        %v1108 = vadd.f32 %v1107, %v1027
        %v1109 = vadd.f32 %v1108, %v1031
        %v1110 = vadd.f32 %v1109, %v1035
        %v1111 = vadd.f32 %v1110, %v1039
        %v1112 = vadd.f32 %v1111, %v1043
        %v1113 = vadd.f32 %v1112, %v1047
        %v1114 = vadd.f32 %v1113, %v1051
        %v1115 = vadd.f32 %v1114, %v1055
        %v1116 = vadd.f32 %v1115, %v1059
        %v1117 = vadd.f32 %v1116, %v1063
        %v1118 = vadd.f32 %v1117, %v1067
        %v1119 = vadd.f32 %v1118, %v1071
        %v1120 = vadd.f32 %v1119, %v1075
        %v1121 = vadd.f32 %v1120, %v1079
        %v1122 = vadd.f32 %v1121, %v1083
        %v1123 = vadd.f32 %v1122, %v1087
        %v1124 = vadd.f32 %v1123, %v1091
        %v1125 = vrot.slane %v1124, 4
        %v1126 = vadd.f32 %v1124, %v1125
        %v1127 = vrot.slane %v1126, 2
        %v1128 = vadd.f32 %v1126, %v1127
        %v1129 = vrot.slane %v1128, 1
        %v1130 = vadd.f32 %v1128, %v1129
        %v1131 = vadd.f32 %v969, %v973
        %v1132 = vadd.f32 %v1131, %v977
        %v1133 = vadd.f32 %v1132, %v981
        %v1134 = vadd.f32 %v1133, %v985
        %v1135 = vadd.f32 %v1134, %v989
        %v1136 = vadd.f32 %v1135, %v993
        %v1137 = vadd.f32 %v1136, %v997
        %v1138 = vadd.f32 %v1137, %v1001
        %v1139 = vadd.f32 %v1138, %v1005
        %v1140 = vadd.f32 %v1139, %v1009
        %v1141 = vadd.f32 %v1140, %v1013
        %v1142 = vadd.f32 %v1141, %v1017
        %v1143 = vadd.f32 %v1142, %v1021
        %v1144 = vadd.f32 %v1143, %v1025
        %v1145 = vadd.f32 %v1144, %v1029
        %v1146 = vadd.f32 %v1145, %v1033
        %v1147 = vadd.f32 %v1146, %v1037
        %v1148 = vadd.f32 %v1147, %v1041
        %v1149 = vadd.f32 %v1148, %v1045
        %v1150 = vadd.f32 %v1149, %v1049
        %v1151 = vadd.f32 %v1150, %v1053
        %v1152 = vadd.f32 %v1151, %v1057
        %v1153 = vadd.f32 %v1152, %v1061
        %v1154 = vadd.f32 %v1153, %v1065
        %v1155 = vadd.f32 %v1154, %v1069
        %v1156 = vadd.f32 %v1155, %v1073
        %v1157 = vadd.f32 %v1156, %v1077
        %v1158 = vadd.f32 %v1157, %v1081
        %v1159 = vadd.f32 %v1158, %v1085
        %v1160 = vadd.f32 %v1159, %v1089
        %v1161 = vadd.f32 %v1160, %v1093
        %v1162 = vrot.slane %v1161, 4
        %v1163 = vadd.f32 %v1161, %v1162
        %v1164 = vrot.slane %v1163, 2
        %v1165 = vadd.f32 %v1163, %v1164
        %v1166 = vrot.slane %v1165, 1
        %v1167 = vadd.f32 %v1165, %v1166
        %v1168 = vrcp.pop %v1130
        %v1169 = vrcp.pop %v1167
        %v1170 = vpack.c.bf16 %v971, %v967
        %v1171 = vpack.c.bf16 %v973, %v969
        %v1172 = vpack.c.bf16 %v979, %v975
        %v1173 = vpack.c.bf16 %v981, %v977
        %v1174 = vpack.c.bf16 %v987, %v983
        %v1175 = vpack.c.bf16 %v989, %v985
        %v1176 = vpack.c.bf16 %v995, %v991
        %v1177 = vpack.c.bf16 %v997, %v993
        %v1178 = vpack.c.bf16 %v1003, %v999
        %v1179 = vpack.c.bf16 %v1005, %v1001
        %v1180 = vpack.c.bf16 %v1011, %v1007
        %v1181 = vpack.c.bf16 %v1013, %v1009
        %v1182 = vpack.c.bf16 %v1019, %v1015
        %v1183 = vpack.c.bf16 %v1021, %v1017
        %v1184 = vpack.c.bf16 %v1027, %v1023
        %v1185 = vpack.c.bf16 %v1029, %v1025
        %v1186 = vpack.c.bf16 %v1035, %v1031
        %v1187 = vpack.c.bf16 %v1037, %v1033
        %v1188 = vpack.c.bf16 %v1043, %v1039
        %v1189 = vpack.c.bf16 %v1045, %v1041
        %v1190 = vpack.c.bf16 %v1051, %v1047
        %v1191 = vpack.c.bf16 %v1053, %v1049
        %v1192 = vpack.c.bf16 %v1059, %v1055
        %v1193 = vpack.c.bf16 %v1061, %v1057
        %v1194 = vpack.c.bf16 %v1067, %v1063
        %v1195 = vpack.c.bf16 %v1069, %v1065
        %v1196 = vpack.c.bf16 %v1075, %v1071
        %v1197 = vpack.c.bf16 %v1077, %v1073
        %v1198 = vpack.c.bf16 %v1083, %v1079
        %v1199 = vpack.c.bf16 %v1085, %v1081
        %v1200 = vpack.c.bf16 %v1091, %v1087
        %v1201 = vpack.c.bf16 %v1093, %v1089
        %1202 = vmatprep.subr.bf16.mxu0 %v1171
        %1203 = vmatpush1.bf16.msra.mxu0 %v1170
        %1204 = vmatprep.subr.bf16.mxu0 %v1173
        %1205 = vmatpush1.bf16.msra.mxu0 %v1172
        %1206 = vmatprep.subr.bf16.mxu0 %v1175
        %1207 = vmatpush1.bf16.msra.mxu0 %v1174
        %1208 = vmatprep.subr.bf16.mxu0 %v1177
        %1209 = vmatpush1.bf16.msra.mxu0 %v1176
        %1210 = vmatprep.subr.bf16.mxu0 %v1179
        %1211 = vmatpush1.bf16.msra.mxu0 %v1178
        %1212 = vmatprep.subr.bf16.mxu0 %v1181
        %1213 = vmatpush1.bf16.msra.mxu0 %v1180
        %1214 = vmatprep.subr.bf16.mxu0 %v1183
        %1215 = vmatpush1.bf16.msra.mxu0 %v1182
        %1216 = vmatprep.subr.bf16.mxu0 %v1185
        %1217 = vmatpush1.bf16.msra.mxu0 %v1184
        %1218 = vmatprep.subr.bf16.mxu0 %v1187
        %1219 = vmatpush1.bf16.msra.mxu0 %v1186
        %1220 = vmatprep.subr.bf16.mxu0 %v1189
        %1221 = vmatpush1.bf16.msra.mxu0 %v1188
        %1222 = vmatprep.subr.bf16.mxu0 %v1191
        %1223 = vmatpush1.bf16.msra.mxu0 %v1190
        %1224 = vmatprep.subr.bf16.mxu0 %v1193
        %1225 = vmatpush1.bf16.msra.mxu0 %v1192
        %1226 = vmatprep.subr.bf16.mxu0 %v1195
        %1227 = vmatpush1.bf16.msra.mxu0 %v1194
        %1228 = vmatprep.subr.bf16.mxu0 %v1197
        %1229 = vmatpush1.bf16.msra.mxu0 %v1196
        %1230 = vmatprep.subr.bf16.mxu0 %v1199
        %1231 = vmatpush1.bf16.msra.mxu0 %v1198
        %1232 = vmatprep.subr.bf16.mxu0 %v1201
        %1233 = vmatpush1.bf16.msra.mxu0 %v1200
        %1234 = vmatprep.mubr.bf16.mxu0 %v580
        %1235 = vmatmul.mubr.bf16.gmra.mrb[0].mxu0 %v579
        %v1236 = vpop.f32.mrb[0].mxu0
        %v1237 = vadd.f32 0.0, %v1236
        %v1238 = vpop.f32.mrb[0].mxu0
        %v1239 = vadd.f32 0.0, %v1238
        %v1240 = vpop.f32.mrb[0].mxu0
        %v1241 = vadd.f32 0.0, %v1240
        %v1242 = vpop.f32.mrb[0].mxu0
        %v1243 = vadd.f32 0.0, %v1242
        %1244 = vmatprep.mubr.bf16.mxu0 %v582
        %1245 = vmatmul.mubr.bf16.gmra.mrb[0].mxu0 %v581
        %v1246 = vpop.f32.mrb[0].mxu0
        %v1247 = vadd.f32 0.0, %v1246
        %v1248 = vpop.f32.mrb[0].mxu0
        %v1249 = vadd.f32 0.0, %v1248
        %v1250 = vpop.f32.mrb[0].mxu0
        %v1251 = vadd.f32 0.0, %v1250
        %v1252 = vpop.f32.mrb[0].mxu0
        %v1253 = vadd.f32 0.0, %v1252
        %1254 = vdwg.mxu0
        %v1255 = vmul.f32 %v1237, %v1168
        %v1256 = vmul.f32 %v1239, %v1169
        %v1257 = vmul.f32 %v1241, %v1168
        %v1258 = vmul.f32 %v1243, %v1169
        %v1259 = vmul.f32 %v1247, %v1168
        %v1260 = vmul.f32 %v1249, %v1169
        %v1261 = vmul.f32 %v1251, %v1168
        %v1262 = vmul.f32 %v1253, %v1169
        %v1263 = vpack.c.bf16 %v445, %v441
        %v1264 = vpack.c.bf16 %v447, %v443
        %v1265 = vpack.c.bf16 %v455, %v451
        %v1266 = vpack.c.bf16 %v457, %v453
        %1267 = vmatprep.subr.bf16.mxu0 %v1264
        %1268 = vmatpush1.bf16.msra.mxu0 %v1263
        %1269 = vmatprep.subr.bf16.mxu0 %v1266
        %1270 = vmatpush1.bf16.msra.mxu0 %v1265
        %1271 = vmatprep.subr.bf16.mxu0 0
        %1272 = vmatpush1.bf16.msra.mxu0 0
        %1273 = vmatprep.subr.bf16.mxu0 0
        %1274 = vmatpush1.bf16.msra.mxu0 0
        %1275 = vmatprep.subr.bf16.mxu0 0
        %1276 = vmatpush1.bf16.msra.mxu0 0
        %1277 = vmatprep.subr.bf16.mxu0 0
        %1278 = vmatpush1.bf16.msra.mxu0 0
        %1279 = vmatprep.subr.bf16.mxu0 0
        %1280 = vmatpush1.bf16.msra.mxu0 0
        %1281 = vmatprep.subr.bf16.mxu0 0
        %1282 = vmatpush1.bf16.msra.mxu0 0
        %1283 = vmatprep.subr.bf16.mxu0 0
        %1284 = vmatpush1.bf16.msra.mxu0 0
        %1285 = vmatprep.subr.bf16.mxu0 0
        %1286 = vmatpush1.bf16.msra.mxu0 0
        %1287 = vmatprep.subr.bf16.mxu0 0
        %1288 = vmatpush1.bf16.msra.mxu0 0
        %1289 = vmatprep.subr.bf16.mxu0 0
        %1290 = vmatpush1.bf16.msra.mxu0 0
        %1291 = vmatprep.subr.bf16.mxu0 0
        %1292 = vmatpush1.bf16.msra.mxu0 0
        %1293 = vmatprep.subr.bf16.mxu0 0
        %1294 = vmatpush1.bf16.msra.mxu0 0
        %1295 = vmatprep.subr.bf16.mxu0 0
        %1296 = vmatpush1.bf16.msra.mxu0 0
        %1297 = vmatprep.subr.bf16.mxu0 0
        %1298 = vmatpush1.bf16.msra.mxu0 0
        %1299 = vmatprep.mubr.bf16.mxu0 0
        %1300 = vmatmul.mubr.bf16.gmra.mrb[0].mxu0 %v588
        %v1301 = vpop.f32.mrb[0].mxu0
        %v1302 = vadd.f32 0.0, %v1301
        %v1303 = vpop.f32.mrb[0].mxu0
        %v1304 = vadd.f32 0.0, %v1303
        %v1305 = vpop.f32.mrb[0].mxu0
        %v1306 = vadd.f32 0.0, %v1305
        %v1307 = vpop.f32.mrb[0].mxu0
        %v1308 = vadd.f32 0.0, %v1307
        %1309 = vmatprep.mubr.bf16.mxu0 0
        %1310 = vmatmul.mubr.bf16.gmra.mrb[0].mxu0 %v591
        %v1311 = vpop.f32.mrb[0].mxu0
        %v1312 = vadd.f32 0.0, %v1311
        %v1313 = vpop.f32.mrb[0].mxu0
        %v1314 = vadd.f32 0.0, %v1313
        %v1315 = vpop.f32.mrb[0].mxu0
        %v1316 = vadd.f32 0.0, %v1315
        %v1317 = vpop.f32.mrb[0].mxu0
        %v1318 = vadd.f32 0.0, %v1317
        %1319 = vmatprep.mubr.bf16.mxu0 0
        %1320 = vmatmul.mubr.bf16.gmra.mrb[0].mxu0 %v594
        %v1321 = vpop.f32.mrb[0].mxu0
        %v1322 = vadd.f32 0.0, %v1321
        %v1323 = vpop.f32.mrb[0].mxu0
        %v1324 = vadd.f32 0.0, %v1323
        %v1325 = vpop.f32.mrb[0].mxu0
        %v1326 = vadd.f32 0.0, %v1325
        %v1327 = vpop.f32.mrb[0].mxu0
        %v1328 = vadd.f32 0.0, %v1327
        %1329 = vmatprep.mubr.bf16.mxu0 0
        %1330 = vmatmul.mubr.bf16.gmra.mrb[0].mxu0 %v597
        %v1331 = vpop.f32.mrb[0].mxu0
        %v1332 = vadd.f32 0.0, %v1331
        %v1333 = vpop.f32.mrb[0].mxu0
        %v1334 = vadd.f32 0.0, %v1333
        %v1335 = vpop.f32.mrb[0].mxu0
        %v1336 = vadd.f32 0.0, %v1335
        %v1337 = vpop.f32.mrb[0].mxu0
        %v1338 = vadd.f32 0.0, %v1337
        %1339 = vmatprep.mubr.bf16.mxu0 0
        %1340 = vmatmul.mubr.bf16.gmra.mrb[0].mxu0 %v600
        %v1341 = vpop.f32.mrb[0].mxu0
        %v1342 = vadd.f32 0.0, %v1341
        %v1343 = vpop.f32.mrb[0].mxu0
        %v1344 = vadd.f32 0.0, %v1343
        %v1345 = vpop.f32.mrb[0].mxu0
        %v1346 = vadd.f32 0.0, %v1345
        %v1347 = vpop.f32.mrb[0].mxu0
        %v1348 = vadd.f32 0.0, %v1347
        %1349 = vmatprep.mubr.bf16.mxu0 0
        %1350 = vmatmul.mubr.bf16.gmra.mrb[0].mxu0 %v603
        %v1351 = vpop.f32.mrb[0].mxu0
        %v1352 = vadd.f32 0.0, %v1351
        %v1353 = vpop.f32.mrb[0].mxu0
        %v1354 = vadd.f32 0.0, %v1353
        %v1355 = vpop.f32.mrb[0].mxu0
        %v1356 = vadd.f32 0.0, %v1355
        %v1357 = vpop.f32.mrb[0].mxu0
        %v1358 = vadd.f32 0.0, %v1357
        %1359 = vmatprep.mubr.bf16.mxu0 0
        %1360 = vmatmul.mubr.bf16.gmra.mrb[0].mxu0 %v606
        %v1361 = vpop.f32.mrb[0].mxu0
        %v1362 = vadd.f32 0.0, %v1361
        %v1363 = vpop.f32.mrb[0].mxu0
        %v1364 = vadd.f32 0.0, %v1363
        %v1365 = vpop.f32.mrb[0].mxu0
        %v1366 = vadd.f32 0.0, %v1365
        %v1367 = vpop.f32.mrb[0].mxu0
        %v1368 = vadd.f32 0.0, %v1367
        %1369 = vmatprep.mubr.bf16.mxu0 0
        %1370 = vmatmul.mubr.bf16.gmra.mrb[0].mxu0 %v609
        %v1371 = vpop.f32.mrb[0].mxu0
        %v1372 = vadd.f32 0.0, %v1371
        %v1373 = vpop.f32.mrb[0].mxu0
        %v1374 = vadd.f32 0.0, %v1373
        %v1375 = vpop.f32.mrb[0].mxu0
        %v1376 = vadd.f32 0.0, %v1375
        %v1377 = vpop.f32.mrb[0].mxu0
        %v1378 = vadd.f32 0.0, %v1377
        %1379 = vmatprep.mubr.bf16.mxu0 0
        %1380 = vmatmul.mubr.bf16.gmra.mrb[0].mxu0 %v612
        %v1381 = vpop.f32.mrb[0].mxu0
        %v1382 = vadd.f32 0.0, %v1381
        %v1383 = vpop.f32.mrb[0].mxu0
        %v1384 = vadd.f32 0.0, %v1383
        %v1385 = vpop.f32.mrb[0].mxu0
        %v1386 = vadd.f32 0.0, %v1385
        %v1387 = vpop.f32.mrb[0].mxu0
        %v1388 = vadd.f32 0.0, %v1387
        %1389 = vmatprep.mubr.bf16.mxu0 0
        %1390 = vmatmul.mubr.bf16.gmra.mrb[0].mxu0 %v615
        %v1391 = vpop.f32.mrb[0].mxu0
        %v1392 = vadd.f32 0.0, %v1391
        %v1393 = vpop.f32.mrb[0].mxu0
        %v1394 = vadd.f32 0.0, %v1393
        %v1395 = vpop.f32.mrb[0].mxu0
        %v1396 = vadd.f32 0.0, %v1395
        %v1397 = vpop.f32.mrb[0].mxu0
        %v1398 = vadd.f32 0.0, %v1397
        %1399 = vmatprep.mubr.bf16.mxu0 0
        %1400 = vmatmul.mubr.bf16.gmra.mrb[0].mxu0 %v618
        %v1401 = vpop.f32.mrb[0].mxu0
        %v1402 = vadd.f32 0.0, %v1401
        %v1403 = vpop.f32.mrb[0].mxu0
        %v1404 = vadd.f32 0.0, %v1403
        %v1405 = vpop.f32.mrb[0].mxu0
        %v1406 = vadd.f32 0.0, %v1405
        %v1407 = vpop.f32.mrb[0].mxu0
        %v1408 = vadd.f32 0.0, %v1407
        %1409 = vmatprep.mubr.bf16.mxu0 0
        %1410 = vmatmul.mubr.bf16.gmra.mrb[0].mxu0 %v621
        %v1411 = vpop.f32.mrb[0].mxu0
        %v1412 = vadd.f32 0.0, %v1411
        %v1413 = vpop.f32.mrb[0].mxu0
        %v1414 = vadd.f32 0.0, %v1413
        %v1415 = vpop.f32.mrb[0].mxu0
        %v1416 = vadd.f32 0.0, %v1415
        %v1417 = vpop.f32.mrb[0].mxu0
        %v1418 = vadd.f32 0.0, %v1417
        %1419 = vmatprep.mubr.bf16.mxu0 0
        %1420 = vmatmul.mubr.bf16.gmra.mrb[0].mxu0 %v624
        %v1421 = vpop.f32.mrb[0].mxu0
        %v1422 = vadd.f32 0.0, %v1421
        %v1423 = vpop.f32.mrb[0].mxu0
        %v1424 = vadd.f32 0.0, %v1423
        %v1425 = vpop.f32.mrb[0].mxu0
        %v1426 = vadd.f32 0.0, %v1425
        %v1427 = vpop.f32.mrb[0].mxu0
        %v1428 = vadd.f32 0.0, %v1427
        %1429 = vmatprep.mubr.bf16.mxu0 0
        %1430 = vmatmul.mubr.bf16.gmra.mrb[0].mxu0 %v627
        %v1431 = vpop.f32.mrb[0].mxu0
        %v1432 = vadd.f32 0.0, %v1431
        %v1433 = vpop.f32.mrb[0].mxu0
        %v1434 = vadd.f32 0.0, %v1433
        %v1435 = vpop.f32.mrb[0].mxu0
        %v1436 = vadd.f32 0.0, %v1435
        %v1437 = vpop.f32.mrb[0].mxu0
        %v1438 = vadd.f32 0.0, %v1437
        %1439 = vmatprep.mubr.bf16.mxu0 0
        %1440 = vmatmul.mubr.bf16.gmra.mrb[0].mxu0 %v630
        %v1441 = vpop.f32.mrb[0].mxu0
        %v1442 = vadd.f32 0.0, %v1441
        %v1443 = vpop.f32.mrb[0].mxu0
        %v1444 = vadd.f32 0.0, %v1443
        %v1445 = vpop.f32.mrb[0].mxu0
        %v1446 = vadd.f32 0.0, %v1445
        %v1447 = vpop.f32.mrb[0].mxu0
        %v1448 = vadd.f32 0.0, %v1447
        %1449 = vmatprep.mubr.bf16.mxu0 0
        %1450 = vmatmul.mubr.bf16.gmra.mrb[0].mxu0 %v633
        %v1451 = vpop.f32.mrb[0].mxu0
        %v1452 = vadd.f32 0.0, %v1451
        %v1453 = vpop.f32.mrb[0].mxu0
        %v1454 = vadd.f32 0.0, %v1453
        %v1455 = vpop.f32.mrb[0].mxu0
        %v1456 = vadd.f32 0.0, %v1455
        %v1457 = vpop.f32.mrb[0].mxu0
        %v1458 = vadd.f32 0.0, %v1457
        %1459 = vdwg.mxu0
        %v1460 = vmax.f32 %v1302, %v1312
        %v1461 = vmax.f32 %v1306, %v1316
        %v1462 = vmax.f32 %v1460, %v1322
        %v1463 = vmax.f32 %v1461, %v1326
        %v1464 = vmax.f32 %v1462, %v1332
        %v1465 = vmax.f32 %v1463, %v1336
        %v1466 = vmax.f32 %v1464, %v1342
        %v1467 = vmax.f32 %v1465, %v1346
        %v1468 = vmax.f32 %v1466, %v1352
        %v1469 = vmax.f32 %v1467, %v1356
        %v1470 = vmax.f32 %v1468, %v1362
        %v1471 = vmax.f32 %v1469, %v1366
        %v1472 = vmax.f32 %v1470, %v1372
        %v1473 = vmax.f32 %v1471, %v1376
        %v1474 = vmax.f32 %v1472, %v1382
        %v1475 = vmax.f32 %v1473, %v1386
        %v1476 = vmax.f32 %v1474, %v1392
        %v1477 = vmax.f32 %v1475, %v1396
        %v1478 = vmax.f32 %v1476, %v1402
        %v1479 = vmax.f32 %v1477, %v1406
        %v1480 = vmax.f32 %v1478, %v1412
        %v1481 = vmax.f32 %v1479, %v1416
        %v1482 = vmax.f32 %v1480, %v1422
        %v1483 = vmax.f32 %v1481, %v1426
        %v1484 = vmax.f32 %v1482, %v1432
        %v1485 = vmax.f32 %v1483, %v1436
        %v1486 = vmax.f32 %v1484, %v1442
        %v1487 = vmax.f32 %v1485, %v1446
        %v1488 = vmax.f32 %v1486, %v1452
        %v1489 = vmax.f32 %v1487, %v1456
        %v1490 = vmax.f32 %v1488, %v1489
        %v1491 = vrot.slane %v1490, 4
        %v1492 = vmax.f32 %v1490, %v1491
        %v1493 = vrot.slane %v1492, 2
        %v1494 = vmax.f32 %v1492, %v1493
        %v1495 = vrot.slane %v1494, 1
        %v1496 = vmax.f32 %v1494, %v1495
        %v1497 = vmax.f32 %v1304, %v1314
        %v1498 = vmax.f32 %v1308, %v1318
        %v1499 = vmax.f32 %v1497, %v1324
        %v1500 = vmax.f32 %v1498, %v1328
        %v1501 = vmax.f32 %v1499, %v1334
        %v1502 = vmax.f32 %v1500, %v1338
        %v1503 = vmax.f32 %v1501, %v1344
        %v1504 = vmax.f32 %v1502, %v1348
        %v1505 = vmax.f32 %v1503, %v1354
        %v1506 = vmax.f32 %v1504, %v1358
        %v1507 = vmax.f32 %v1505, %v1364
        %v1508 = vmax.f32 %v1506, %v1368
        %v1509 = vmax.f32 %v1507, %v1374
        %v1510 = vmax.f32 %v1508, %v1378
        %v1511 = vmax.f32 %v1509, %v1384
        %v1512 = vmax.f32 %v1510, %v1388
        %v1513 = vmax.f32 %v1511, %v1394
        %v1514 = vmax.f32 %v1512, %v1398
        %v1515 = vmax.f32 %v1513, %v1404
        %v1516 = vmax.f32 %v1514, %v1408
        %v1517 = vmax.f32 %v1515, %v1414
        %v1518 = vmax.f32 %v1516, %v1418
        %v1519 = vmax.f32 %v1517, %v1424
        %v1520 = vmax.f32 %v1518, %v1428
        %v1521 = vmax.f32 %v1519, %v1434
        %v1522 = vmax.f32 %v1520, %v1438
        %v1523 = vmax.f32 %v1521, %v1444
        %v1524 = vmax.f32 %v1522, %v1448
        %v1525 = vmax.f32 %v1523, %v1454
        %v1526 = vmax.f32 %v1524, %v1458
        %v1527 = vmax.f32 %v1525, %v1526
        %v1528 = vrot.slane %v1527, 4
        %v1529 = vmax.f32 %v1527, %v1528
        %v1530 = vrot.slane %v1529, 2
        %v1531 = vmax.f32 %v1529, %v1530
        %v1532 = vrot.slane %v1531, 1
        %v1533 = vmax.f32 %v1531, %v1532
        %v1534 = vsub.f32 %v1302, %v1496
        %v1535 = vsub.f32 %v1304, %v1533
        %v1536 = vsub.f32 %v1306, %v1496
        %v1537 = vsub.f32 %v1308, %v1533
        %v1538 = vsub.f32 %v1312, %v1496
        %v1539 = vsub.f32 %v1314, %v1533
        %v1540 = vsub.f32 %v1316, %v1496
        %v1541 = vsub.f32 %v1318, %v1533
        %v1542 = vsub.f32 %v1322, %v1496
        %v1543 = vsub.f32 %v1324, %v1533
        %v1544 = vsub.f32 %v1326, %v1496
        %v1545 = vsub.f32 %v1328, %v1533
        %v1546 = vsub.f32 %v1332, %v1496
        %v1547 = vsub.f32 %v1334, %v1533
        %v1548 = vsub.f32 %v1336, %v1496
        %v1549 = vsub.f32 %v1338, %v1533
        %v1550 = vsub.f32 %v1342, %v1496
        %v1551 = vsub.f32 %v1344, %v1533
        %v1552 = vsub.f32 %v1346, %v1496
        %v1553 = vsub.f32 %v1348, %v1533
        %v1554 = vsub.f32 %v1352, %v1496
        %v1555 = vsub.f32 %v1354, %v1533
        %v1556 = vsub.f32 %v1356, %v1496
        %v1557 = vsub.f32 %v1358, %v1533
        %v1558 = vsub.f32 %v1362, %v1496
        %v1559 = vsub.f32 %v1364, %v1533
        %v1560 = vsub.f32 %v1366, %v1496
        %v1561 = vsub.f32 %v1368, %v1533
        %v1562 = vsub.f32 %v1372, %v1496
        %v1563 = vsub.f32 %v1374, %v1533
        %v1564 = vsub.f32 %v1376, %v1496
        %v1565 = vsub.f32 %v1378, %v1533
        %v1566 = vsub.f32 %v1382, %v1496
        %v1567 = vsub.f32 %v1384, %v1533
        %v1568 = vsub.f32 %v1386, %v1496
        %v1569 = vsub.f32 %v1388, %v1533
        %v1570 = vsub.f32 %v1392, %v1496
        %v1571 = vsub.f32 %v1394, %v1533
        %v1572 = vsub.f32 %v1396, %v1496
        %v1573 = vsub.f32 %v1398, %v1533
        %v1574 = vsub.f32 %v1402, %v1496
        %v1575 = vsub.f32 %v1404, %v1533
        %v1576 = vsub.f32 %v1406, %v1496
        %v1577 = vsub.f32 %v1408, %v1533
        %v1578 = vsub.f32 %v1412, %v1496
        %v1579 = vsub.f32 %v1414, %v1533
        %v1580 = vsub.f32 %v1416, %v1496
        %v1581 = vsub.f32 %v1418, %v1533
        %v1582 = vsub.f32 %v1422, %v1496
        %v1583 = vsub.f32 %v1424, %v1533
        %v1584 = vsub.f32 %v1426, %v1496
        %v1585 = vsub.f32 %v1428, %v1533
        %v1586 = vsub.f32 %v1432, %v1496
        %v1587 = vsub.f32 %v1434, %v1533
        %v1588 = vsub.f32 %v1436, %v1496
        %v1589 = vsub.f32 %v1438, %v1533
        %v1590 = vsub.f32 %v1442, %v1496
        %v1591 = vsub.f32 %v1444, %v1533
        %v1592 = vsub.f32 %v1446, %v1496
        %v1593 = vsub.f32 %v1448, %v1533
        %v1594 = vsub.f32 %v1452, %v1496
        %v1595 = vsub.f32 %v1454, %v1533
        %v1596 = vsub.f32 %v1456, %v1496
        %v1597 = vsub.f32 %v1458, %v1533
        %v1598 = vmul.f32 %v1534, 1.442695
        %v1599 = vpow.pop %v1598
        %v1600 = vmul.f32 %v1535, 1.442695
        %v1601 = vpow.pop %v1600
        %v1602 = vmul.f32 %v1536, 1.442695
        %v1603 = vpow.pop %v1602
        %v1604 = vmul.f32 %v1537, 1.442695
        %v1605 = vpow.pop %v1604
        %v1606 = vmul.f32 %v1538, 1.442695
        %v1607 = vpow.pop %v1606
        %v1608 = vmul.f32 %v1539, 1.442695
        %v1609 = vpow.pop %v1608
        %v1610 = vmul.f32 %v1540, 1.442695
        %v1611 = vpow.pop %v1610
        %v1612 = vmul.f32 %v1541, 1.442695
        %v1613 = vpow.pop %v1612
        %v1614 = vmul.f32 %v1542, 1.442695
        %v1615 = vpow.pop %v1614
        %v1616 = vmul.f32 %v1543, 1.442695
        %v1617 = vpow.pop %v1616
        %v1618 = vmul.f32 %v1544, 1.442695
        %v1619 = vpow.pop %v1618
        %v1620 = vmul.f32 %v1545, 1.442695
        %v1621 = vpow.pop %v1620
        %v1622 = vmul.f32 %v1546, 1.442695
        %v1623 = vpow.pop %v1622
        %v1624 = vmul.f32 %v1547, 1.442695
        %v1625 = vpow.pop %v1624
        %v1626 = vmul.f32 %v1548, 1.442695
        %v1627 = vpow.pop %v1626
        %v1628 = vmul.f32 %v1549, 1.442695
        %v1629 = vpow.pop %v1628
        %v1630 = vmul.f32 %v1550, 1.442695
        %v1631 = vpow.pop %v1630
        %v1632 = vmul.f32 %v1551, 1.442695
        %v1633 = vpow.pop %v1632
        %v1634 = vmul.f32 %v1552, 1.442695
        %v1635 = vpow.pop %v1634
        %v1636 = vmul.f32 %v1553, 1.442695
        %v1637 = vpow.pop %v1636
        %v1638 = vmul.f32 %v1554, 1.442695
        %v1639 = vpow.pop %v1638
        %v1640 = vmul.f32 %v1555, 1.442695
        %v1641 = vpow.pop %v1640
        %v1642 = vmul.f32 %v1556, 1.442695
        %v1643 = vpow.pop %v1642
        %v1644 = vmul.f32 %v1557, 1.442695
        %v1645 = vpow.pop %v1644
        %v1646 = vmul.f32 %v1558, 1.442695
        %v1647 = vpow.pop %v1646
        %v1648 = vmul.f32 %v1559, 1.442695
        %v1649 = vpow.pop %v1648
        %v1650 = vmul.f32 %v1560, 1.442695
        %v1651 = vpow.pop %v1650
        %v1652 = vmul.f32 %v1561, 1.442695
        %v1653 = vpow.pop %v1652
        %v1654 = vmul.f32 %v1562, 1.442695
        %v1655 = vpow.pop %v1654
        %v1656 = vmul.f32 %v1563, 1.442695
        %v1657 = vpow.pop %v1656
        %v1658 = vmul.f32 %v1564, 1.442695
        %v1659 = vpow.pop %v1658
        %v1660 = vmul.f32 %v1565, 1.442695
        %v1661 = vpow.pop %v1660
        %v1662 = vmul.f32 %v1566, 1.442695
        %v1663 = vpow.pop %v1662
        %v1664 = vmul.f32 %v1567, 1.442695
        %v1665 = vpow.pop %v1664
        %v1666 = vmul.f32 %v1568, 1.442695
        %v1667 = vpow.pop %v1666
        %v1668 = vmul.f32 %v1569, 1.442695
        %v1669 = vpow.pop %v1668
        %v1670 = vmul.f32 %v1570, 1.442695
        %v1671 = vpow.pop %v1670
        %v1672 = vmul.f32 %v1571, 1.442695
        %v1673 = vpow.pop %v1672
        %v1674 = vmul.f32 %v1572, 1.442695
        %v1675 = vpow.pop %v1674
        %v1676 = vmul.f32 %v1573, 1.442695
        %v1677 = vpow.pop %v1676
        %v1678 = vmul.f32 %v1574, 1.442695
        %v1679 = vpow.pop %v1678
        %v1680 = vmul.f32 %v1575, 1.442695
        %v1681 = vpow.pop %v1680
        %v1682 = vmul.f32 %v1576, 1.442695
        %v1683 = vpow.pop %v1682
        %v1684 = vmul.f32 %v1577, 1.442695
        %v1685 = vpow.pop %v1684
        %v1686 = vmul.f32 %v1578, 1.442695
        %v1687 = vpow.pop %v1686
        %v1688 = vmul.f32 %v1579, 1.442695
        %v1689 = vpow.pop %v1688
        %v1690 = vmul.f32 %v1580, 1.442695
        %v1691 = vpow.pop %v1690
        %v1692 = vmul.f32 %v1581, 1.442695
        %v1693 = vpow.pop %v1692
        %v1694 = vmul.f32 %v1582, 1.442695
        %v1695 = vpow.pop %v1694
        %v1696 = vmul.f32 %v1583, 1.442695
        %v1697 = vpow.pop %v1696
        %v1698 = vmul.f32 %v1584, 1.442695
        %v1699 = vpow.pop %v1698
        %v1700 = vmul.f32 %v1585, 1.442695
        %v1701 = vpow.pop %v1700
        %v1702 = vmul.f32 %v1586, 1.442695
        %v1703 = vpow.pop %v1702
        %v1704 = vmul.f32 %v1587, 1.442695
        %v1705 = vpow.pop %v1704
        %v1706 = vmul.f32 %v1588, 1.442695
        %v1707 = vpow.pop %v1706
        %v1708 = vmul.f32 %v1589, 1.442695
        %v1709 = vpow.pop %v1708
        %v1710 = vmul.f32 %v1590, 1.442695
        %v1711 = vpow.pop %v1710
        %v1712 = vmul.f32 %v1591, 1.442695
        %v1713 = vpow.pop %v1712
        %v1714 = vmul.f32 %v1592, 1.442695
        %v1715 = vpow.pop %v1714
        %v1716 = vmul.f32 %v1593, 1.442695
        %v1717 = vpow.pop %v1716
        %v1718 = vmul.f32 %v1594, 1.442695
        %v1719 = vpow.pop %v1718
        %v1720 = vmul.f32 %v1595, 1.442695
        %v1721 = vpow.pop %v1720
        %v1722 = vmul.f32 %v1596, 1.442695
        %v1723 = vpow.pop %v1722
        %v1724 = vmul.f32 %v1597, 1.442695
        %v1725 = vpow.pop %v1724
        %v1726 = vadd.f32 %v1599, %v1603
        %v1727 = vadd.f32 %v1726, %v1607
        %v1728 = vadd.f32 %v1727, %v1611
        %v1729 = vadd.f32 %v1728, %v1615
        %v1730 = vadd.f32 %v1729, %v1619
        %v1731 = vadd.f32 %v1730, %v1623
        %v1732 = vadd.f32 %v1731, %v1627
        %v1733 = vadd.f32 %v1732, %v1631
        %v1734 = vadd.f32 %v1733, %v1635
        %v1735 = vadd.f32 %v1734, %v1639
        %v1736 = vadd.f32 %v1735, %v1643
        %v1737 = vadd.f32 %v1736, %v1647
        %v1738 = vadd.f32 %v1737, %v1651
        %v1739 = vadd.f32 %v1738, %v1655
        %v1740 = vadd.f32 %v1739, %v1659
        %v1741 = vadd.f32 %v1740, %v1663
        %v1742 = vadd.f32 %v1741, %v1667
        %v1743 = vadd.f32 %v1742, %v1671
        %v1744 = vadd.f32 %v1743, %v1675
        %v1745 = vadd.f32 %v1744, %v1679
        %v1746 = vadd.f32 %v1745, %v1683
        %v1747 = vadd.f32 %v1746, %v1687
        %v1748 = vadd.f32 %v1747, %v1691
        %v1749 = vadd.f32 %v1748, %v1695
        %v1750 = vadd.f32 %v1749, %v1699
        %v1751 = vadd.f32 %v1750, %v1703
        %v1752 = vadd.f32 %v1751, %v1707
        %v1753 = vadd.f32 %v1752, %v1711
        %v1754 = vadd.f32 %v1753, %v1715
        %v1755 = vadd.f32 %v1754, %v1719
        %v1756 = vadd.f32 %v1755, %v1723
        %v1757 = vrot.slane %v1756, 4
        %v1758 = vadd.f32 %v1756, %v1757
        %v1759 = vrot.slane %v1758, 2
        %v1760 = vadd.f32 %v1758, %v1759
        %v1761 = vrot.slane %v1760, 1
        %v1762 = vadd.f32 %v1760, %v1761
        %v1763 = vadd.f32 %v1601, %v1605
        %v1764 = vadd.f32 %v1763, %v1609
        %v1765 = vadd.f32 %v1764, %v1613
        %v1766 = vadd.f32 %v1765, %v1617
        %v1767 = vadd.f32 %v1766, %v1621
        %v1768 = vadd.f32 %v1767, %v1625
        %v1769 = vadd.f32 %v1768, %v1629
        %v1770 = vadd.f32 %v1769, %v1633
        %v1771 = vadd.f32 %v1770, %v1637
        %v1772 = vadd.f32 %v1771, %v1641
        %v1773 = vadd.f32 %v1772, %v1645
        %v1774 = vadd.f32 %v1773, %v1649
        %v1775 = vadd.f32 %v1774, %v1653
        %v1776 = vadd.f32 %v1775, %v1657
        %v1777 = vadd.f32 %v1776, %v1661
        %v1778 = vadd.f32 %v1777, %v1665
        %v1779 = vadd.f32 %v1778, %v1669
        %v1780 = vadd.f32 %v1779, %v1673
        %v1781 = vadd.f32 %v1780, %v1677
        %v1782 = vadd.f32 %v1781, %v1681
        %v1783 = vadd.f32 %v1782, %v1685
        %v1784 = vadd.f32 %v1783, %v1689
        %v1785 = vadd.f32 %v1784, %v1693
        %v1786 = vadd.f32 %v1785, %v1697
        %v1787 = vadd.f32 %v1786, %v1701
        %v1788 = vadd.f32 %v1787, %v1705
        %v1789 = vadd.f32 %v1788, %v1709
        %v1790 = vadd.f32 %v1789, %v1713
        %v1791 = vadd.f32 %v1790, %v1717
        %v1792 = vadd.f32 %v1791, %v1721
        %v1793 = vadd.f32 %v1792, %v1725
        %v1794 = vrot.slane %v1793, 4
        %v1795 = vadd.f32 %v1793, %v1794
        %v1796 = vrot.slane %v1795, 2
        %v1797 = vadd.f32 %v1795, %v1796
        %v1798 = vrot.slane %v1797, 1
        %v1799 = vadd.f32 %v1797, %v1798
        %v1800 = vrcp.pop %v1762
        %v1801 = vrcp.pop %v1799
        %v1802 = vpack.c.bf16 %v1603, %v1599
        %v1803 = vpack.c.bf16 %v1605, %v1601
        %v1804 = vpack.c.bf16 %v1611, %v1607
        %v1805 = vpack.c.bf16 %v1613, %v1609
        %v1806 = vpack.c.bf16 %v1619, %v1615
        %v1807 = vpack.c.bf16 %v1621, %v1617
        %v1808 = vpack.c.bf16 %v1627, %v1623
        %v1809 = vpack.c.bf16 %v1629, %v1625
        %v1810 = vpack.c.bf16 %v1635, %v1631
        %v1811 = vpack.c.bf16 %v1637, %v1633
        %v1812 = vpack.c.bf16 %v1643, %v1639
        %v1813 = vpack.c.bf16 %v1645, %v1641
        %v1814 = vpack.c.bf16 %v1651, %v1647
        %v1815 = vpack.c.bf16 %v1653, %v1649
        %v1816 = vpack.c.bf16 %v1659, %v1655
        %v1817 = vpack.c.bf16 %v1661, %v1657
        %v1818 = vpack.c.bf16 %v1667, %v1663
        %v1819 = vpack.c.bf16 %v1669, %v1665
        %v1820 = vpack.c.bf16 %v1675, %v1671
        %v1821 = vpack.c.bf16 %v1677, %v1673
        %v1822 = vpack.c.bf16 %v1683, %v1679
        %v1823 = vpack.c.bf16 %v1685, %v1681
        %v1824 = vpack.c.bf16 %v1691, %v1687
        %v1825 = vpack.c.bf16 %v1693, %v1689
        %v1826 = vpack.c.bf16 %v1699, %v1695
        %v1827 = vpack.c.bf16 %v1701, %v1697
        %v1828 = vpack.c.bf16 %v1707, %v1703
        %v1829 = vpack.c.bf16 %v1709, %v1705
        %v1830 = vpack.c.bf16 %v1715, %v1711
        %v1831 = vpack.c.bf16 %v1717, %v1713
        %v1832 = vpack.c.bf16 %v1723, %v1719
        %v1833 = vpack.c.bf16 %v1725, %v1721
        %1834 = vmatprep.subr.bf16.mxu0 %v1803
        %1835 = vmatpush1.bf16.msra.mxu0 %v1802
        %1836 = vmatprep.subr.bf16.mxu0 %v1805
        %1837 = vmatpush1.bf16.msra.mxu0 %v1804
        %1838 = vmatprep.subr.bf16.mxu0 %v1807
        %1839 = vmatpush1.bf16.msra.mxu0 %v1806
        %1840 = vmatprep.subr.bf16.mxu0 %v1809
        %1841 = vmatpush1.bf16.msra.mxu0 %v1808
        %1842 = vmatprep.subr.bf16.mxu0 %v1811
        %1843 = vmatpush1.bf16.msra.mxu0 %v1810
        %1844 = vmatprep.subr.bf16.mxu0 %v1813
        %1845 = vmatpush1.bf16.msra.mxu0 %v1812
        %1846 = vmatprep.subr.bf16.mxu0 %v1815
        %1847 = vmatpush1.bf16.msra.mxu0 %v1814
        %1848 = vmatprep.subr.bf16.mxu0 %v1817
        %1849 = vmatpush1.bf16.msra.mxu0 %v1816
        %1850 = vmatprep.subr.bf16.mxu0 %v1819
        %1851 = vmatpush1.bf16.msra.mxu0 %v1818
        %1852 = vmatprep.subr.bf16.mxu0 %v1821
        %1853 = vmatpush1.bf16.msra.mxu0 %v1820
        %1854 = vmatprep.subr.bf16.mxu0 %v1823
        %1855 = vmatpush1.bf16.msra.mxu0 %v1822
        %1856 = vmatprep.subr.bf16.mxu0 %v1825
        %1857 = vmatpush1.bf16.msra.mxu0 %v1824
        %1858 = vmatprep.subr.bf16.mxu0 %v1827
        %1859 = vmatpush1.bf16.msra.mxu0 %v1826
        %1860 = vmatprep.subr.bf16.mxu0 %v1829
        %1861 = vmatpush1.bf16.msra.mxu0 %v1828
        %1862 = vmatprep.subr.bf16.mxu0 %v1831
        %1863 = vmatpush1.bf16.msra.mxu0 %v1830
        %1864 = vmatprep.subr.bf16.mxu0 %v1833
        %1865 = vmatpush1.bf16.msra.mxu0 %v1832
        %1866 = vmatprep.mubr.bf16.mxu0 %v580
        %1867 = vmatmul.mubr.bf16.gmra.mrb[0].mxu0 %v579
        %v1868 = vpop.f32.mrb[0].mxu0
        %v1869 = vadd.f32 0.0, %v1868
        %v1870 = vpop.f32.mrb[0].mxu0
        %v1871 = vadd.f32 0.0, %v1870
        %v1872 = vpop.f32.mrb[0].mxu0
        %v1873 = vadd.f32 0.0, %v1872
        %v1874 = vpop.f32.mrb[0].mxu0
        %v1875 = vadd.f32 0.0, %v1874
        %1876 = vmatprep.mubr.bf16.mxu0 %v582
        %1877 = vmatmul.mubr.bf16.gmra.mrb[0].mxu0 %v581
        %v1878 = vpop.f32.mrb[0].mxu0
        %v1879 = vadd.f32 0.0, %v1878
        %v1880 = vpop.f32.mrb[0].mxu0
        %v1881 = vadd.f32 0.0, %v1880
        %v1882 = vpop.f32.mrb[0].mxu0
        %v1883 = vadd.f32 0.0, %v1882
        %v1884 = vpop.f32.mrb[0].mxu0
        %v1885 = vadd.f32 0.0, %v1884
        %1886 = vdwg.mxu0
        %v1887 = vmul.f32 %v1869, %v1800
        %v1888 = vmul.f32 %v1871, %v1801
        %v1889 = vmul.f32 %v1873, %v1800
        %v1890 = vmul.f32 %v1875, %v1801
        %v1891 = vmul.f32 %v1879, %v1800
        %v1892 = vmul.f32 %v1881, %v1801
        %v1893 = vmul.f32 %v1883, %v1800
        %v1894 = vmul.f32 %v1885, %v1801
        %v1895 = vpack.c.bf16 %v1257, %v1255
        %v1896 = vpack.c.bf16 %v1258, %v1256
        %v1897 = vpack.c.bf16 %v1261, %v1259
        %v1898 = vpack.c.bf16 %v1262, %v1260
        %v1899 = vpack.c.bf16 %v1889, %v1887
        %v1900 = vpack.c.bf16 %v1890, %v1888
        %v1901 = vpack.c.bf16 %v1893, %v1891
        %v1902 = vpack.c.bf16 %v1894, %v1892
        %v1903 = vld [vmem:[%s3] sm:$0xf]
        %v1904 = vld [vmem:[%s3 + $0x4] sm:$0xf]
        %v1905 = vld [vmem:[%s3 + $0x8] sm:$0xf]
        %v1906 = vld [vmem:[%s3 + $0xc] sm:$0xf]
        %v1911 = vunpack.c.l.b16 %v1903
        %v1912 = vunpack.c.l.b16 %v1904
        %v1913 = vunpack.c.l.b16 %v1905
        %v1914 = vunpack.c.l.b16 %v1906
        %v1915 = vpack.c.b16 %v1912, %v1911
        %v1916 = vpack.c.b16 %v1914, %v1913
        %vm1917 = vcmask 523264
        %v1919 = vsel %vm1917, %v1915, 0
        %v1922 = vsel %vm1917, %v1916, 0
        %1924 = vmatprep.subr.bf16.mxu0 %v1896
        %1925 = vmatpush1.bf16.msra.mxu0 %v1895
        %1926 = vmatprep.subr.bf16.mxu0 %v1898
        %1927 = vmatpush1.bf16.msra.mxu0 %v1897
        %1928 = vmatprep.subr.bf16.mxu0 %v1900
        %1929 = vmatpush1.bf16.msra.mxu0 %v1899
        %1930 = vmatprep.subr.bf16.mxu0 %v1902
        %1931 = vmatpush1.bf16.msra.mxu0 %v1901
        %1932 = vmatprep.subr.bf16.mxu0 0
        %1933 = vmatpush1.bf16.msra.mxu0 0
        %1934 = vmatprep.subr.bf16.mxu0 0
        %1935 = vmatpush1.bf16.msra.mxu0 0
        %1936 = vmatprep.subr.bf16.mxu0 0
        %1937 = vmatpush1.bf16.msra.mxu0 0
        %1938 = vmatprep.subr.bf16.mxu0 0
        %1939 = vmatpush1.bf16.msra.mxu0 0
        %1940 = vmatprep.subr.bf16.mxu0 0
        %1941 = vmatpush1.bf16.msra.mxu0 0
        %1942 = vmatprep.subr.bf16.mxu0 0
        %1943 = vmatpush1.bf16.msra.mxu0 0
        %1944 = vmatprep.subr.bf16.mxu0 0
        %1945 = vmatpush1.bf16.msra.mxu0 0
        %1946 = vmatprep.subr.bf16.mxu0 0
        %1947 = vmatpush1.bf16.msra.mxu0 0
        %1948 = vmatprep.subr.bf16.mxu0 0
        %1949 = vmatpush1.bf16.msra.mxu0 0
        %1950 = vmatprep.subr.bf16.mxu0 0
        %1951 = vmatpush1.bf16.msra.mxu0 0
        %1952 = vmatprep.subr.bf16.mxu0 0
        %1953 = vmatpush1.bf16.msra.mxu0 0
        %1954 = vmatprep.subr.bf16.mxu0 0
        %1955 = vmatpush1.bf16.msra.mxu0 0
        %1956 = vmatprep.mubr.bf16.mxu0 0
        %1957 = vmatmul.mubr.bf16.gmra.mrb[0].mxu0 %v1919
        %v1958 = vpop.f32.mrb[0].mxu0
        %v1959 = vadd.f32 %v197, %v1958
        %v1960 = vpop.f32.mrb[0].mxu0
        %v1961 = vadd.f32 %v198, %v1960
        %v1962 = vpop.f32.mrb[0].mxu0
        %v1963 = vadd.f32 %v199, %v1962
        %v1964 = vpop.f32.mrb[0].mxu0
        %v1965 = vadd.f32 %v200, %v1964
        %1966 = vmatprep.mubr.bf16.mxu0 0
        %1967 = vmatmul.mubr.bf16.gmra.mrb[0].mxu0 %v1922
        %v1968 = vpop.f32.mrb[0].mxu0
        %v1969 = vadd.f32 %v201, %v1968
        %v1970 = vpop.f32.mrb[0].mxu0
        %v1971 = vadd.f32 %v202, %v1970
        %v1972 = vpop.f32.mrb[0].mxu0
        %v1973 = vadd.f32 %v203, %v1972
        %v1974 = vpop.f32.mrb[0].mxu0
        %v1975 = vadd.f32 %v204, %v1974
        %1976 = vdwg.mxu0
        %1977 = vst [vmem:[%s190] sm:$0xff] %v1959
        %1978 = vst [vmem:[%s190 + $0x8] sm:$0xff] %v1961
        %1979 = vst [vmem:[%s190 + $0x10] sm:$0xff] %v1963
        %1980 = vst [vmem:[%s190 + $0x18] sm:$0xff] %v1965
        %1981 = vst [vmem:[%s190 + $0x20] sm:$0xff] %v1969
        %1982 = vst [vmem:[%s190 + $0x28] sm:$0xff] %v1971
        %1983 = vst [vmem:[%s190 + $0x30] sm:$0xff] %v1973
        %1984 = vst [vmem:[%s190 + $0x38] sm:$0xff] %v1975
        %s1985 = sand.u32 %s115, 1
        %s1986 = scalar_lea.sflag [#allocation3], %s1985
        %s1987 = sand.u32 %s115, 1
        %s1988 = smul.addr %s1987, 64
        %s1989 = scalar_lea.vmem [#allocation2], %s1988
        // Predicated region
        $region37: #{tpu_custom_call.1} parent=35 // pred_check
          %p1990 = pneg %p125
        $region38: #{tpu_custom_call.1} parent=35 // pred_check_branch
          %1992 = sbr.rel (%p1990) target = $region40
        $region39: #{tpu_custom_call.1} parent=35 // pred_region
          %s1994 = ssub.s32 1024, 1024
          %1995 = vsyncadd %s1986, %s1994
          %s1996 = smul.addr %s18, 8
          %s1997 = smul.addr %s1996, 128
          %s1998 = scalar_lea.hbm %s4, %s1997
          %s1999 = sshll.u32 %s1989, 4
          %s2000 = int_to_ptr.vmem [resolvable:$true] %s1999
          %2005 = dma.vmem_to_hbm [thread:$0]  %s2000, 1024, %s1998, %s1986, 256, 256, 16
        $region40: #{tpu_custom_call.1} parent=35 // pred_fallthru
          _
      $region36: #{tpu_custom_call.1} parent=5 // pred_fallthru
        _
      %p2006 = scmp.le.s32.totalorder 2, %s13
      // Predicated region
      $region41: #{tpu_custom_call.1} parent=5 // pred_check
        %p2007 = pneg %p2006
      $region42: #{tpu_custom_call.1} parent=5 // pred_check_branch
        %2009 = sbr.rel (%p2007) target = $region44
      $region43: #{tpu_custom_call.1} parent=5 // pred_region
        %s2010 = ssub.s32 %s13, 2
        // Predicated region
        $region45: #{tpu_custom_call.1} parent=43 // pred_check
          %p2011 = pneg %p131
        $region46: #{tpu_custom_call.1} parent=43 // pred_check_branch
          %2013 = sbr.rel (%p2011) target = $region48
        $region47: #{tpu_custom_call.1} parent=43 // pred_region
          %s2014 = sand.u32 %s116, 1
          %s2015 = scalar_lea.sflag [#allocation3], %s2014
          %s2016 = sand.u32 %s116, 1
          %s2017 = smul.addr %s2016, 64
          %s2018 = scalar_lea.vmem [#allocation2], %s2017
          %2019 = dma.done %s2015, 1024
        $region48: #{tpu_custom_call.1} parent=43 // pred_fallthru
          _
      $region44: #{tpu_custom_call.1} parent=5 // pred_fallthru
        _
    $region6: #{tpu_custom_call.1} parent=1 // loop_footer
      %s17 = sadd.s32 1, %s13
    $region7: #{tpu_custom_call.1} parent=1 // loop_footer_branch
      %12 = sbr.rel target = $region3
    $region8: #{tpu_custom_call.1} parent=1 // loop_exit
      _
    %2020 = vsyncpa [#allocation3], 1
    %s2021 = scalar_lea.sflag [#allocation3], 1
    %2022 = vsyncpa %s2021, 1

</llo_original>
